<compile_context>
chip_gen: v7x
topology: tpu7x:2x2x1
jax: 0.10.0
libtpu: 0.0.40
codegen_flags: <defaults>
</compile_context>

<pallas_src>
import numpy as np
import jax
import jax.numpy as jnp
from jax.experimental import pallas as pl
from jax.experimental.pallas import tpu as pltpu


def _round_up(n, m):
    return ((n + m - 1) // m) * m


# ----------------------------------------------------------------------------
# Pallas kernel: encoder -> reparametrization -> decoder, packed lane-dense out
# ----------------------------------------------------------------------------
def _make_bvae_kernel(Dm, I, L, H, A1, A2, out_width, mxu_dtype):
    def kernel(xm_ref, xi_ref, eps_ref, wA_ref, wB_ref, bias_ref, out_ref):
        f32 = jnp.float32
        xm = xm_ref[...]                 # (TB, Dm)  mutable columns
        xi = xi_ref[...]                 # (TB, I)   immutable, non-sensitive cols
        eps = eps_ref[...]               # (TB, L)   reparametrization noise

        # packed weight slab A: rows are sublane(8)-aligned groups -> H columns
        w1 = wA_ref[0:Dm, :]             # (Dm, H) encoder hidden
        wd1z = wA_ref[A1:A1 + L, :]      # (L, H)  decoder hidden, latent part
        wd1i = wA_ref[A2:A2 + I, :]      # (I, H)  decoder hidden, immutable part
        # packed weight slab B: H rows -> [mu|log_var | out] columns
        wmulv = wB_ref[:, 0:2 * L]                 # (H, 2L) fused mu/log_var heads
        wout = wB_ref[:, 2 * L:2 * L + Dm]         # (H, Dm) decoder output
        # packed bias row: [b1 | bmu|blv | bd1 | bout]
        bias = bias_ref[...]
        b1 = bias[:, 0:H]
        bmulv = bias[:, H:H + 2 * L]
        bd1 = bias[:, H + 2 * L:2 * H + 2 * L]
        bout = bias[:, 2 * H + 2 * L:2 * H + 2 * L + Dm]

        md = mxu_dtype  # bf16 MXU operands (f32 accumulation); f32 elementwise

        # shared encoder hidden layer: Linear + ReLU
        h = jnp.dot(xm.astype(md), w1.astype(md),
                    preferred_element_type=f32) + b1
        h = jnp.maximum(h, 0.0)

        # fused mu / log_var heads (one matmul instead of two)
        y = jnp.dot(h.astype(md), wmulv.astype(md),
                    preferred_element_type=f32) + bmulv
        mu = y[:, 0:L]
        lv = y[:, L:2 * L]

        # reparametrization trick (f32, EUP exp)
        std = jnp.exp(0.5 * lv)
        z1 = mu + std * eps

        # decoder hidden on concat([z1, x_immutable]) expressed as split matmul
        hd = (jnp.dot(z1.astype(md), wd1z.astype(md), preferred_element_type=f32)
              + jnp.dot(xi.astype(md), wd1i.astype(md), preferred_element_type=f32)
              + bd1)
        hd = jnp.maximum(hd, 0.0)

        logits = jnp.dot(hd.astype(md), wout.astype(md),
                         preferred_element_type=f32) + bout
        recon = jax.nn.sigmoid(logits)

        # single lane-dense packed output: [recon | mu | lv | z1 | 0-pad]
        tb = recon.shape[0]
        pad = out_width - (Dm + 3 * L)
        pieces = [recon, mu, lv, z1]
        if pad > 0:
            pieces.append(jnp.zeros((tb, pad), f32))
        out_ref[...] = jnp.concatenate(pieces, axis=-1)

    return kernel


# ----------------------------------------------------------------------------
# pallas_call wrapper (batch-gridded, weights pinned via constant index_maps)
# ----------------------------------------------------------------------------
def bvae_pallas_forward_core(x_mut, x_imm, eps, wA, wB, brow, dims, *,
                             tb=128, out_width=128, mxu_dtype=jnp.bfloat16):
    Dm, I, L, H = dims
    B = x_mut.shape[0]
    tb = min(tb, B)
    assert B % tb == 0, "batch must be a multiple of the batch tile"
    assert tb % 8 == 0 or tb == B, "batch tile must be sublane-aligned"
    assert out_width >= Dm + 3 * L and out_width % 128 == 0

    A1 = _round_up(Dm, 8)
    A2 = A1 + _round_up(L, 8)
    kernel = _make_bvae_kernel(Dm, I, L, H, A1, A2, out_width, mxu_dtype)

    grid = (B // tb,)

    def batch_spec(width):
        return pl.BlockSpec((tb, width), lambda i: (i, 0))

    def const_spec(arr):
        # full-array block, constant index -> DMA'd once, VMEM-resident
        return pl.BlockSpec(arr.shape, lambda i: (0, 0))

    flops = 2 * B * (Dm * H + H * 2 * L + (L + I) * H + H * Dm)
    transcendentals = B * (L + Dm)                  # exp (std) + sigmoid
    bytes_accessed = 4 * (B * (Dm + I + L + out_width)
                          + int(wA.size) + int(wB.size) + int(brow.size))

    return pl.pallas_call(
        kernel,
        out_shape=jax.ShapeDtypeStruct((B, out_width), jnp.float32),
        grid_spec=pltpu.PrefetchScalarGridSpec(
            num_scalar_prefetch=0,
            grid=grid,
            in_specs=[
                batch_spec(Dm),       # x_mutable
                batch_spec(I),        # x_immutable (non-sensitive)
                batch_spec(L),        # eps
                const_spec(wA),       # packed weight slab A
                const_spec(wB),       # packed weight slab B
                const_spec(brow),     # packed bias row
            ],
            out_specs=pl.BlockSpec((tb, out_width), lambda i: (i, 0)),
        ),
        compiler_params=pltpu.CompilerParams(
            dimension_semantics=("parallel",),   # shard batch grid over v7x's 2 TCs
            vmem_limit_bytes=32 * 1024 * 1024,   # explicit; safe on v7x 64 MiB VMEM
        ),
        cost_estimate=pl.CostEstimate(
            flops=flops,
            transcendentals=transcendentals,
            bytes_accessed=bytes_accessed),
    )(x_mut, x_imm, eps, wA, wB, brow)


# ----------------------------------------------------------------------------
# Parameter construction + packing (mirrors the nn.Linear shapes)
# ----------------------------------------------------------------------------
def init_params(key, layers, n_immutable_nonsens):
    """layers = [Dm, H, L]; decoder input dim = L + (#immutable - 1)."""
    Dm, H, L = layers
    I = n_immutable_nonsens
    dec_in = L + I

    def linear(k, fan_in, fan_out):
        kw, kb = jax.random.split(k)
        bound = 1.0 / np.sqrt(fan_in)
        W = jax.random.uniform(kw, (fan_out, fan_in), jnp.float32, -bound, bound)
        b = jax.random.uniform(kb, (fan_out,), jnp.float32, -bound, bound)
        return np.asarray(W), np.asarray(b)

    keys = jax.random.split(key, 5)
    W1, b1 = linear(keys[0], Dm, H)          # shared encoder hidden layer
    Wmu, bmu = linear(keys[1], H, L)         # mu head
    Wlv, blv = linear(keys[2], H, L)         # log_var head
    Wd1, bd1 = linear(keys[3], dec_in, H)    # decoder hidden layer
    Wout, bout = linear(keys[4], H, Dm)      # decoder output layer (sigmoid)

    # --- pack everything into 3 kernel inputs -------------------------------
    A1 = _round_up(Dm, 8)
    A2 = A1 + _round_up(L, 8)
    A_rows = A2 + _round_up(I, 8)
    wA = np.zeros((A_rows, H), np.float32)
    wA[0:Dm, :] = W1.T                 # encoder hidden
    wA[A1:A1 + L, :] = Wd1[:, :L].T    # decoder hidden, latent part
    wA[A2:A2 + I, :] = Wd1[:, L:].T    # decoder hidden, immutable part

    wB = np.concatenate([Wmu.T, Wlv.T, Wout.T], axis=1).astype(np.float32)
    brow = np.concatenate([b1, bmu, blv, bd1, bout])[None, :].astype(np.float32)

    return jnp.asarray(wA), jnp.asarray(wB), jnp.asarray(brow)


# ----------------------------------------------------------------------------
# Full module-level forward (glue: mask gather/scatter in plain JAX)
# ----------------------------------------------------------------------------
def bvae_forward(x, eps, packed, mutable_mask, sen_mask, dims, *,
                 tb=128, mxu_dtype=jnp.bfloat16):
    wA, wB, brow = packed
    Dm, I, L, H = dims
    mutable_mask = np.asarray(mutable_mask, dtype=bool)
    sen_mask = np.asarray(sen_mask, dtype=bool)
    mut_idx = np.where(mutable_mask)[0]
    imm_idx = np.where(np.logical_and(~mutable_mask, ~sen_mask))[0]
    sen_idx = np.where(sen_mask)[0]
    nonsens_idx = np.where(~sen_mask)[0]

    x_mut = x[:, mut_idx]
    x_imm = x[:, imm_idx]
    x_sens = x[:, sen_idx]

    out_slab = bvae_pallas_forward_core(
        x_mut, x_imm, eps, wA, wB, brow, dims, tb=tb, mxu_dtype=mxu_dtype)

    recon = out_slab[:, 0:Dm]
    mu = out_slab[:, Dm:Dm + L]
    lv = out_slab[:, Dm + L:Dm + 2 * L]
    z1 = out_slab[:, Dm + 2 * L:Dm + 3 * L]

    # write recon back into the mutable columns; contiguous fast path avoids
    # the scatter-by-index full copy of x.
    # TODO(synk): for very large B the remaining copy could be removed by
    # aliasing x into the kernel via input_output_aliases.
    if mut_idx.size and np.all(np.diff(mut_idx) == 1):
        x_out = jax.lax.dynamic_update_slice(x, recon, (0, int(mut_idx[0])))
    else:
        x_out = x.at[:, mut_idx].set(recon)

    x_nonsens = x_out[:, nonsens_idx]
    return x_out, mu, lv, x_sens, x_nonsens, z1


# ----------------------------------------------------------------------------
# Demo
# ----------------------------------------------------------------------------
if __name__ == "__main__":
    B = 256                 # two batch tiles of 128 -> exercises the grid
    D = 16                  # total feature columns
    layers = [12, 32, 8]    # [n_mutable, hidden, latent]

    # columns 0..11 mutable; 12..15 immutable; column 15 is the sensitive one
    mutable_mask = np.array([True] * 12 + [False] * 4)
    sen_mask = np.array([False] * 15 + [True])
    Dm = int(np.sum(mutable_mask))
    I = int(np.sum(np.logical_and(~mutable_mask, ~sen_mask)))   # = 3
    H, L = layers[1], layers[2]
    dims = (Dm, I, L, H)

    key = jax.random.PRNGKey(0)
    k_params, k_x, k_eps = jax.random.split(key, 3)

    packed = init_params(k_params, [Dm, H, L], I)
    # data in [0,1] (sigmoid reconstruction targets, as in the torch module)
    x = jax.random.uniform(k_x, (B, D), jnp.float32)
    # deterministic epsilon for the reparametrization trick
    # (torch.randn_like replaced by an explicit fixed-seed normal input)
    eps = jax.random.normal(k_eps, (B, L), jnp.float32)

    outs = bvae_forward(x, eps, packed, mutable_mask, sen_mask, dims,
                        tb=128, mxu_dtype=jnp.bfloat16)
    outs = jax.block_until_ready(outs)

    x_out, mu, lv, x_sens, x_nonsens, z1 = outs
    assert x_out.shape == (B, D)
    assert mu.shape == (B, L) and lv.shape == (B, L)
    assert x_sens.shape == (B, 1)
    assert x_nonsens.shape == (B, D - 1)
    assert z1.shape == (B, L)
    for a in (x_out, mu, lv, z1):
        assert bool(jnp.all(jnp.isfinite(a)))
    # reconstructed (mutable) columns come out of a sigmoid -> in [0, 1]
    assert bool(jnp.all((x_out[:, :Dm] >= 0.0) & (x_out[:, :Dm] <= 1.0)))
    print("KERNEL_OK")
</pallas_src>

<mosaic_0001>
module attributes {stable_mosaic.version = 11 : i64} {
  func.func @kernel(%arg0: i32, %arg1: memref<128x12xf32, #tpu.memory_space<vmem>>, %arg2: memref<128x3xf32, #tpu.memory_space<vmem>>, %arg3: memref<128x8xf32, #tpu.memory_space<vmem>>, %arg4: memref<32x32xf32, #tpu.memory_space<vmem>>, %arg5: memref<32x28xf32, #tpu.memory_space<vmem>>, %arg6: memref<1x92xf32, #tpu.memory_space<vmem>>, %arg7: memref<128x128xf32, #tpu.memory_space<vmem>>) attributes {dimension_semantics = [#tpu.dimension_semantics<parallel>], iteration_bounds = array<i64: 2>, scalar_prefetch = 0 : i64, scratch_operands = 0 : i64, tpu.core_type = #tpu.core_type<tc>, window_params = [{transform_indices = @transform_0, window_bounds = array<i64: 128, 12>}, {transform_indices = @transform_1, window_bounds = array<i64: 128, 3>}, {transform_indices = @transform_2, window_bounds = array<i64: 128, 8>}, {pipeline_mode = #tpu.pipeline_mode<synchronous>, transform_indices = @transform_3, window_bounds = array<i64: 32, 32>}, {pipeline_mode = #tpu.pipeline_mode<synchronous>, transform_indices = @transform_4, window_bounds = array<i64: 32, 28>}, {pipeline_mode = #tpu.pipeline_mode<synchronous>, transform_indices = @transform_5, window_bounds = array<i64: 1, 92>}, {transform_indices = @transform_6, window_bounds = array<i64: 128, 128>}]} {
    %c0 = arith.constant 0 : index
    %c0_0 = arith.constant 0 : index
    %0 = vector.load %arg1[%c0, %c0_0] : memref<128x12xf32, #tpu.memory_space<vmem>>, vector<128x12xf32>
    %c0_1 = arith.constant 0 : index
    %c0_2 = arith.constant 0 : index
    %1 = vector.load %arg2[%c0_1, %c0_2] : memref<128x3xf32, #tpu.memory_space<vmem>>, vector<128x3xf32>
    %c0_3 = arith.constant 0 : index
    %c0_4 = arith.constant 0 : index
    %2 = vector.load %arg3[%c0_3, %c0_4] : memref<128x8xf32, #tpu.memory_space<vmem>>, vector<128x8xf32>
    %c0_5 = arith.constant 0 : index
    %c0_6 = arith.constant 0 : index
    %3 = vector.load %arg4[%c0_5, %c0_6] : memref<32x32xf32, #tpu.memory_space<vmem>>, vector<12x32xf32>
    %c16 = arith.constant 16 : index
    %c0_7 = arith.constant 0 : index
    %4 = vector.load %arg4[%c16, %c0_7] : memref<32x32xf32, #tpu.memory_space<vmem>>, vector<8x32xf32>
    %c24 = arith.constant 24 : index
    %c0_8 = arith.constant 0 : index
    %5 = vector.load %arg4[%c24, %c0_8] : memref<32x32xf32, #tpu.memory_space<vmem>>, vector<3x32xf32>
    %c0_9 = arith.constant 0 : index
    %c0_10 = arith.constant 0 : index
    %6 = vector.load %arg5[%c0_9, %c0_10] : memref<32x28xf32, #tpu.memory_space<vmem>>, vector<32x16xf32>
    %c0_11 = arith.constant 0 : index
    %c16_12 = arith.constant 16 : index
    %7 = vector.load %arg5[%c0_11, %c16_12] : memref<32x28xf32, #tpu.memory_space<vmem>>, vector<32x12xf32>
    %c0_13 = arith.constant 0 : index
    %c0_14 = arith.constant 0 : index
    %8 = vector.load %arg6[%c0_13, %c0_14] : memref<1x92xf32, #tpu.memory_space<vmem>>, vector<1x92xf32>
    %9 = vector.extract_strided_slice %8 {offsets = [0, 0], sizes = [1, 32], strides = [1, 1]} : vector<1x92xf32> to vector<1x32xf32>
    %10 = vector.extract_strided_slice %8 {offsets = [0, 32], sizes = [1, 16], strides = [1, 1]} : vector<1x92xf32> to vector<1x16xf32>
    %11 = vector.extract_strided_slice %8 {offsets = [0, 48], sizes = [1, 32], strides = [1, 1]} : vector<1x92xf32> to vector<1x32xf32>
    %12 = vector.extract_strided_slice %8 {offsets = [0, 80], sizes = [1, 12], strides = [1, 1]} : vector<1x92xf32> to vector<1x12xf32>
    %13 = arith.truncf %0 : vector<128x12xf32> to vector<128x12xbf16>
    %14 = arith.truncf %3 : vector<12x32xf32> to vector<12x32xbf16>
    %cst = arith.constant dense<0.000000e+00> : vector<128x32xf32>
    %15 = tpu.matmul %13, %14, %cst {dimension_numbers = #tpu.dot_dimension_numbers<[1], [0], [0], [1], [0, 0, 1, 1], [], []>} : vector<128x12xbf16>, vector<12x32xbf16>, vector<128x32xf32> -> vector<128x32xf32>
    %16 = vector.broadcast %9 : vector<1x32xf32> to vector<128x32xf32>
    %17 = arith.addf %15, %16 : vector<128x32xf32>
    %cst_15 = arith.constant 0.000000e+00 : f32
    %18 = vector.broadcast %cst_15 : f32 to vector<128x32xf32>
    %19 = arith.maximumf %17, %18 : vector<128x32xf32>
    %20 = arith.truncf %19 : vector<128x32xf32> to vector<128x32xbf16>
    %21 = arith.truncf %6 : vector<32x16xf32> to vector<32x16xbf16>
    %cst_16 = arith.constant dense<0.000000e+00> : vector<128x16xf32>
    %22 = tpu.matmul %20, %21, %cst_16 {dimension_numbers = #tpu.dot_dimension_numbers<[1], [0], [0], [1], [0, 0, 1, 1], [], []>} : vector<128x32xbf16>, vector<32x16xbf16>, vector<128x16xf32> -> vector<128x16xf32>
    %23 = vector.broadcast %10 : vector<1x16xf32> to vector<128x16xf32>
    %24 = arith.addf %22, %23 : vector<128x16xf32>
    %25 = vector.extract_strided_slice %24 {offsets = [0, 0], sizes = [128, 8], strides = [1, 1]} : vector<128x16xf32> to vector<128x8xf32>
    %26 = vector.extract_strided_slice %24 {offsets = [0, 8], sizes = [128, 8], strides = [1, 1]} : vector<128x16xf32> to vector<128x8xf32>
    %cst_17 = arith.constant 5.000000e-01 : f32
    %27 = vector.broadcast %cst_17 : f32 to vector<128x8xf32>
    %28 = arith.mulf %27, %26 : vector<128x8xf32>
    %29 = math.exp %28 : vector<128x8xf32>
    %30 = arith.mulf %29, %2 : vector<128x8xf32>
    %31 = arith.addf %25, %30 : vector<128x8xf32>
    %32 = arith.truncf %31 : vector<128x8xf32> to vector<128x8xbf16>
    %33 = arith.truncf %4 : vector<8x32xf32> to vector<8x32xbf16>
    %cst_18 = arith.constant dense<0.000000e+00> : vector<128x32xf32>
    %34 = tpu.matmul %32, %33, %cst_18 {dimension_numbers = #tpu.dot_dimension_numbers<[1], [0], [0], [1], [0, 0, 1, 1], [], []>} : vector<128x8xbf16>, vector<8x32xbf16>, vector<128x32xf32> -> vector<128x32xf32>
    %35 = arith.truncf %1 : vector<128x3xf32> to vector<128x3xbf16>
    %36 = arith.truncf %5 : vector<3x32xf32> to vector<3x32xbf16>
    %cst_19 = arith.constant dense<0.000000e+00> : vector<128x32xf32>
    %37 = tpu.matmul %35, %36, %cst_19 {dimension_numbers = #tpu.dot_dimension_numbers<[1], [0], [0], [1], [0, 0, 1, 1], [], []>} : vector<128x3xbf16>, vector<3x32xbf16>, vector<128x32xf32> -> vector<128x32xf32>
    %38 = arith.addf %34, %37 : vector<128x32xf32>
    %39 = vector.broadcast %11 : vector<1x32xf32> to vector<128x32xf32>
    %40 = arith.addf %38, %39 : vector<128x32xf32>
    %cst_20 = arith.constant 0.000000e+00 : f32
    %41 = vector.broadcast %cst_20 : f32 to vector<128x32xf32>
    %42 = arith.maximumf %40, %41 : vector<128x32xf32>
    %43 = arith.truncf %42 : vector<128x32xf32> to vector<128x32xbf16>
    %44 = arith.truncf %7 : vector<32x12xf32> to vector<32x12xbf16>
    %cst_21 = arith.constant dense<0.000000e+00> : vector<128x12xf32>
    %45 = tpu.matmul %43, %44, %cst_21 {dimension_numbers = #tpu.dot_dimension_numbers<[1], [0], [0], [1], [0, 0, 1, 1], [], []>} : vector<128x32xbf16>, vector<32x12xbf16>, vector<128x12xf32> -> vector<128x12xf32>
    %46 = vector.broadcast %12 : vector<1x12xf32> to vector<128x12xf32>
    %47 = arith.addf %45, %46 : vector<128x12xf32>
    %48 = arith.negf %47 : vector<128x12xf32>
    %49 = math.exp %48 : vector<128x12xf32>
    %cst_22 = arith.constant 1.000000e+00 : f32
    %50 = vector.broadcast %cst_22 : f32 to vector<128x12xf32>
    %51 = arith.addf %50, %49 : vector<128x12xf32>
    %52 = arith.divf %50, %51 : vector<128x12xf32>
    %cst_23 = arith.constant 0.000000e+00 : f32
    %53 = vector.broadcast %cst_23 : f32 to vector<128x92xf32>
    %54 = tpu.concatenate %52, %25, %26, %31, %53 in 1 : vector<128x12xf32>, vector<128x8xf32>, vector<128x8xf32>, vector<128x8xf32>, vector<128x92xf32> -> vector<128x128xf32>
    %c0_24 = arith.constant 0 : index
    %c0_25 = arith.constant 0 : index
    %55 = vector.load %arg7[%c0_24, %c0_25] : memref<128x128xf32, #tpu.memory_space<vmem>>, vector<128x128xf32>
    tpu.vector_store %arg7[%c0_24, %c0_25], %54 {strides = array<i32>} : memref<128x128xf32, #tpu.memory_space<vmem>>, vector<128x128xf32>,
    return
  }
  func.func @transform_0(%arg0: i32) -> (i32, i32) {
    %c0_i32 = arith.constant 0 : i32
    %c0_i32_0 = arith.constant 0 : i32
    return %arg0, %c0_i32 : i32, i32
  }
  func.func @transform_1(%arg0: i32) -> (i32, i32) {
    %c0_i32 = arith.constant 0 : i32
    %c0_i32_0 = arith.constant 0 : i32
    return %arg0, %c0_i32 : i32, i32
  }
  func.func @transform_2(%arg0: i32) -> (i32, i32) {
    %c0_i32 = arith.constant 0 : i32
    %c0_i32_0 = arith.constant 0 : i32
    return %arg0, %c0_i32 : i32, i32
  }
  func.func @transform_3(%arg0: i32) -> (i32, i32) {
    %c0_i32 = arith.constant 0 : i32
    %c0_i32_0 = arith.constant 0 : i32
    %c0_i32_1 = arith.constant 0 : i32
    return %c0_i32, %c0_i32_0 : i32, i32
  }
  func.func @transform_4(%arg0: i32) -> (i32, i32) {
    %c0_i32 = arith.constant 0 : i32
    %c0_i32_0 = arith.constant 0 : i32
    %c0_i32_1 = arith.constant 0 : i32
    return %c0_i32, %c0_i32_0 : i32, i32
  }
  func.func @transform_5(%arg0: i32) -> (i32, i32) {
    %c0_i32 = arith.constant 0 : i32
    %c0_i32_0 = arith.constant 0 : i32
    %c0_i32_1 = arith.constant 0 : i32
    return %c0_i32, %c0_i32_0 : i32, i32
  }
  func.func @transform_6(%arg0: i32) -> (i32, i32) {
    %c0_i32 = arith.constant 0 : i32
    %c0_i32_0 = arith.constant 0 : i32
    return %arg0, %c0_i32 : i32, i32
  }
}

</mosaic_0001>

<llo_original>
// kernel: tpu_custom_call.1
$region0: #{tpu_custom_call.1}
  #allocation0 [shape = 'u32[]', space=smem, size = 0x4, offset = 0x4, fixed_abs, tag = 'smem constant byte address 0x4 - core index']
  #allocation1 [shape = 'u32[144,128]{1,0:T(1,128)}', space=vmem, size = 0x12000, scoped, tag = 'internal scratch']
  %s0 = inlined_call_operand.vmem [shape: f32[256,12], index: 0, kind: input, shape index: {}]
  %s1 = inlined_call_operand.vmem [shape: f32[256,3], index: 1, kind: input, shape index: {}]
  %s2 = inlined_call_operand.vmem [shape: f32[256,8], index: 2, kind: input, shape index: {}]
  %s3 = inlined_call_operand.vmem [shape: f32[32,32], index: 3, kind: input, shape index: {}]
  %s4 = inlined_call_operand.vmem [shape: f32[32,28], index: 4, kind: input, shape index: {}]
  %s5 = inlined_call_operand.vmem [shape: f32[1,92], index: 5, kind: input, shape index: {}]
  %s6 = inlined_call_operand.hbm [shape: f32[256,128], index: 6, kind: output, shape index: {}]
  %s7 = sld [smem:[#allocation0]]
  $region57: #{tpu_custom_call.1} parent=0
    _
  %s9 = ssub.s32 1, %s7
  %s10 = scalar_select 0, %s9, %s7
  $region1: #{tpu_custom_call.1} parent=0
    #allocation2 [shape = 'u8[131072]{0}', space=vmem, size = 0x20000, scoped, tag = 'output window, operand 0']
    #allocation3 [shape = 's32[2]{0}', space=sflag, size = 0x8, scoped, tag = 'scoped memory for tpu_custom_call.1']
    %11 = vsyncpa [#allocation3], 0
    %s12 = scalar_lea.sflag [#allocation3], 1
    %13 = vsyncpa %s12, 0
    loop: start=0, step=1, limit=4
    $region2: #{tpu_custom_call.1} parent=1 // loop_pre_header
      _
    $region3: #{tpu_custom_call.1} parent=1 // loop_header
      %s15 = sphi 0, %s19
      %p16 = scmp.ge.s32.totalorder %s15, 4
      %s25 = sphi 0, %s27
      %s28 = sphi 0, %s25
      %s29 = sphi 0, %s28
      %s45 = sphi 0, %s29
      %s51 = sphi 0, %s53
      %s54 = sphi 0, %s51
      %s55 = sphi 0, %s54
      %s71 = sphi 0, %s55
      %s77 = sphi 0, %s79
      %s80 = sphi 0, %s77
      %s81 = sphi 0, %s80
      %s97 = sphi 0, %s81
      %s101 = sphi 0, %s101
      %s103 = sphi 0, %s101
      %s104 = sphi 0, %s103
      %s118 = sphi 0, %s104
      %s122 = sphi 0, %s122
      %s124 = sphi 0, %s122
      %s125 = sphi 0, %s124
      %s139 = sphi 0, %s125
      %s143 = sphi 0, %s143
      %s145 = sphi 0, %s143
      %s146 = sphi 0, %s145
      %s160 = sphi 0, %s146
      %s166 = sphi 0, %s168
      %s169 = sphi 0, %s166
      %s170 = sphi 0, %s169
      %s186 = sphi 0, %s170
    $region4: #{tpu_custom_call.1} parent=1 // loop_header_branch
      %18 = sbr.rel (%p16) target = $region8
    $region5: #{tpu_custom_call.1} parent=1 // loop_body
      %s20 = ssub.s32 %s15, 1
      %s21 = ssub.s32 %s15, 2
      %s22 = sadd.s32 %s15, 1
      %s23 = ssub.s32 %s15, %s22
      %p24 = scmp.eq.s32.totalorder %s23, 0
      %s26 = sadd.s32 %s25, 1
      %s27 = scalar_select %p24, %s25, %s26
      %p30 = pneg %p24
      %p31 = scmp.eq.s32.totalorder %s15, 1
      %p32 = por %p30, %p31
      %p33 = scmp.ne.s32.totalorder %s25, %s28
      %p34 = scmp.eq.s32.totalorder %s15, 0
      %p35 = por %p33, %p34
      %p36 = scmp.ne.s32.totalorder %s25, %s28
      %p37 = scmp.eq.s32.totalorder %s20, 1
      %p38 = por %p36, %p37
      %p39 = scmp.ne.s32.totalorder %s28, %s29
      %p40 = scmp.eq.s32.totalorder %s20, 0
      %p41 = por %p39, %p40
      %p42 = scmp.ne.s32.totalorder %s28, %s29
      %p43 = scmp.eq.s32.totalorder %s21, 1
      %p44 = por %p42, %p43
      %p46 = scmp.ne.s32.totalorder %s29, %s45
      %p47 = scmp.eq.s32.totalorder %s21, 0
      %p48 = por %p46, %p47
      %s49 = ssub.s32 %s15, %s22
      %p50 = scmp.eq.s32.totalorder %s49, 0
      %s52 = sadd.s32 %s51, 1
      %s53 = scalar_select %p50, %s51, %s52
      %p56 = pneg %p50
      %p57 = scmp.eq.s32.totalorder %s15, 1
      %p58 = por %p56, %p57
      %p59 = scmp.ne.s32.totalorder %s51, %s54
      %p60 = scmp.eq.s32.totalorder %s15, 0
      %p61 = por %p59, %p60
      %p62 = scmp.ne.s32.totalorder %s51, %s54
      %p63 = scmp.eq.s32.totalorder %s20, 1
      %p64 = por %p62, %p63
      %p65 = scmp.ne.s32.totalorder %s54, %s55
      %p66 = scmp.eq.s32.totalorder %s20, 0
      %p67 = por %p65, %p66
      %p68 = scmp.ne.s32.totalorder %s54, %s55
      %p69 = scmp.eq.s32.totalorder %s21, 1
      %p70 = por %p68, %p69
      %p72 = scmp.ne.s32.totalorder %s55, %s71
      %p73 = scmp.eq.s32.totalorder %s21, 0
      %p74 = por %p72, %p73
      %s75 = ssub.s32 %s15, %s22
      %p76 = scmp.eq.s32.totalorder %s75, 0
      %s78 = sadd.s32 %s77, 1
      %s79 = scalar_select %p76, %s77, %s78
      %p82 = pneg %p76
      %p83 = scmp.eq.s32.totalorder %s15, 1
      %p84 = por %p82, %p83
      %p85 = scmp.ne.s32.totalorder %s77, %s80
      %p86 = scmp.eq.s32.totalorder %s15, 0
      %p87 = por %p85, %p86
      %p88 = scmp.ne.s32.totalorder %s77, %s80
      %p89 = scmp.eq.s32.totalorder %s20, 1
      %p90 = por %p88, %p89
      %p91 = scmp.ne.s32.totalorder %s80, %s81
      %p92 = scmp.eq.s32.totalorder %s20, 0
      %p93 = por %p91, %p92
      %p94 = scmp.ne.s32.totalorder %s80, %s81
      %p95 = scmp.eq.s32.totalorder %s21, 1
      %p96 = por %p94, %p95
      %p98 = scmp.ne.s32.totalorder %s81, %s97
      %p99 = scmp.eq.s32.totalorder %s21, 0
      %p100 = por %p98, %p99
      %s102 = sadd.s32 %s101, 1
      %p105 = scmp.eq.s32.totalorder %s15, 1
      %p106 = scmp.ne.s32.totalorder %s101, %s103
      %p107 = scmp.eq.s32.totalorder %s15, 0
      %p108 = por %p106, %p107
      %p109 = scmp.ne.s32.totalorder %s101, %s103
      %p110 = scmp.eq.s32.totalorder %s20, 1
      %p111 = por %p109, %p110
      %p112 = scmp.ne.s32.totalorder %s103, %s104
      %p113 = scmp.eq.s32.totalorder %s20, 0
      %p114 = por %p112, %p113
      %p115 = scmp.ne.s32.totalorder %s103, %s104
      %p116 = scmp.eq.s32.totalorder %s21, 1
      %p117 = por %p115, %p116
      %p119 = scmp.ne.s32.totalorder %s104, %s118
      %p120 = scmp.eq.s32.totalorder %s21, 0
      %p121 = por %p119, %p120
      %s123 = sadd.s32 %s122, 1
      %p126 = scmp.eq.s32.totalorder %s15, 1
      %p127 = scmp.ne.s32.totalorder %s122, %s124
      %p128 = scmp.eq.s32.totalorder %s15, 0
      %p129 = por %p127, %p128
      %p130 = scmp.ne.s32.totalorder %s122, %s124
      %p131 = scmp.eq.s32.totalorder %s20, 1
      %p132 = por %p130, %p131
      %p133 = scmp.ne.s32.totalorder %s124, %s125
      %p134 = scmp.eq.s32.totalorder %s20, 0
      %p135 = por %p133, %p134
      %p136 = scmp.ne.s32.totalorder %s124, %s125
      %p137 = scmp.eq.s32.totalorder %s21, 1
      %p138 = por %p136, %p137
      %p140 = scmp.ne.s32.totalorder %s125, %s139
      %p141 = scmp.eq.s32.totalorder %s21, 0
      %p142 = por %p140, %p141
      %s144 = sadd.s32 %s143, 1
      %p147 = scmp.eq.s32.totalorder %s15, 1
      %p148 = scmp.ne.s32.totalorder %s143, %s145
      %p149 = scmp.eq.s32.totalorder %s15, 0
      %p150 = por %p148, %p149
      %p151 = scmp.ne.s32.totalorder %s143, %s145
      %p152 = scmp.eq.s32.totalorder %s20, 1
      %p153 = por %p151, %p152
      %p154 = scmp.ne.s32.totalorder %s145, %s146
      %p155 = scmp.eq.s32.totalorder %s20, 0
      %p156 = por %p154, %p155
      %p157 = scmp.ne.s32.totalorder %s145, %s146
      %p158 = scmp.eq.s32.totalorder %s21, 1
      %p159 = por %p157, %p158
      %p161 = scmp.ne.s32.totalorder %s146, %s160
      %p162 = scmp.eq.s32.totalorder %s21, 0
      %p163 = por %p161, %p162
      %s164 = ssub.s32 %s15, %s22
      %p165 = scmp.eq.s32.totalorder %s164, 0
      %s167 = sadd.s32 %s166, 1
      %s168 = scalar_select %p165, %s166, %s167
      %p171 = pneg %p165
      %p172 = scmp.eq.s32.totalorder %s15, 1
      %p173 = por %p171, %p172
      %p174 = scmp.ne.s32.totalorder %s166, %s169
      %p175 = scmp.eq.s32.totalorder %s15, 0
      %p176 = por %p174, %p175
      %p177 = scmp.ne.s32.totalorder %s166, %s169
      %p178 = scmp.eq.s32.totalorder %s20, 1
      %p179 = por %p177, %p178
      %p180 = scmp.ne.s32.totalorder %s169, %s170
      %p181 = scmp.eq.s32.totalorder %s20, 0
      %p182 = por %p180, %p181
      %p183 = scmp.ne.s32.totalorder %s169, %s170
      %p184 = scmp.eq.s32.totalorder %s21, 1
      %p185 = por %p183, %p184
      %p187 = scmp.ne.s32.totalorder %s170, %s186
      %p188 = scmp.eq.s32.totalorder %s21, 0
      %p189 = por %p187, %p188
      %p190 = scmp.le.s32.totalorder 1, %s15
      %p191 = scmp.lt.s32.totalorder %s15, 3
      %p192 = pnand %p190, %p191
      %p193 = pneg %p192
      // Predicated region
      $region9: #{tpu_custom_call.1} parent=5 // pred_check
        _
      $region10: #{tpu_custom_call.1} parent=5 // pred_check_branch
        %195 = sbr.rel (%p192) target = $region12
      $region11: #{tpu_custom_call.1} parent=5 // pred_region
        %s196 = ssub.s32 %s15, 1
        // Predicated region
        $region13: #{tpu_custom_call.1} parent=11 // pred_check
          %p197 = pneg %p114
        $region14: #{tpu_custom_call.1} parent=11 // pred_check_branch
          %199 = sbr.rel (%p197) target = $region16
        $region15: #{tpu_custom_call.1} parent=11 // pred_region
          _
        $region16: #{tpu_custom_call.1} parent=11 // pred_fallthru
          _
        // Predicated region
        $region17: #{tpu_custom_call.1} parent=11 // pred_check
          %p200 = pneg %p135
        $region18: #{tpu_custom_call.1} parent=11 // pred_check_branch
          %202 = sbr.rel (%p200) target = $region20
        $region19: #{tpu_custom_call.1} parent=11 // pred_region
          _
        $region20: #{tpu_custom_call.1} parent=11 // pred_fallthru
          _
        // Predicated region
        $region21: #{tpu_custom_call.1} parent=11 // pred_check
          %p203 = pneg %p156
        $region22: #{tpu_custom_call.1} parent=11 // pred_check_branch
          %205 = sbr.rel (%p203) target = $region24
        $region23: #{tpu_custom_call.1} parent=11 // pred_region
          _
        $region24: #{tpu_custom_call.1} parent=11 // pred_fallthru
          _
      $region12: #{tpu_custom_call.1} parent=5 // pred_fallthru
        _
      %p206 = scmp.lt.s32.totalorder %s15, 2
      // Predicated region
      $region25: #{tpu_custom_call.1} parent=5 // pred_check
        %p207 = pneg %p206
      $region26: #{tpu_custom_call.1} parent=5 // pred_check_branch
        %209 = sbr.rel (%p207) target = $region28
      $region27: #{tpu_custom_call.1} parent=5 // pred_region
        // Predicated region
        $region29: #{tpu_custom_call.1} parent=27 // pred_check
          %p210 = pneg %p35
        $region30: #{tpu_custom_call.1} parent=27 // pred_check_branch
          %212 = sbr.rel (%p210) target = $region32
        $region31: #{tpu_custom_call.1} parent=27 // pred_region
          %s213 = smul.u32 16, %s15
          %p214 = scmp.lt.s32.totalorder %s213, 31
          %s215 = scalar_select %p214, %s213, 31
          %s216 = smul.addr %s215, 8
          %s217 = scalar_lea.vmem %s0, %s216
          %s218 = smul.u32 16, %s15
        $region32: #{tpu_custom_call.1} parent=27 // pred_fallthru
          _
        // Predicated region
        $region33: #{tpu_custom_call.1} parent=27 // pred_check
          %p219 = pneg %p61
        $region34: #{tpu_custom_call.1} parent=27 // pred_check_branch
          %221 = sbr.rel (%p219) target = $region36
        $region35: #{tpu_custom_call.1} parent=27 // pred_region
          %s222 = smul.u32 16, %s15
          %p223 = scmp.lt.s32.totalorder %s222, 31
          %s224 = scalar_select %p223, %s222, 31
          %s225 = smul.addr %s224, 8
          %s226 = scalar_lea.vmem %s1, %s225
          %s227 = smul.u32 16, %s15
        $region36: #{tpu_custom_call.1} parent=27 // pred_fallthru
          _
        // Predicated region
        $region37: #{tpu_custom_call.1} parent=27 // pred_check
          %p228 = pneg %p87
        $region38: #{tpu_custom_call.1} parent=27 // pred_check_branch
          %230 = sbr.rel (%p228) target = $region40
        $region39: #{tpu_custom_call.1} parent=27 // pred_region
          %s231 = smul.u32 16, %s15
          %p232 = scmp.lt.s32.totalorder %s231, 31
          %s233 = scalar_select %p232, %s231, 31
          %s234 = smul.addr %s233, 8
          %s235 = scalar_lea.vmem %s2, %s234
          %s236 = smul.u32 16, %s15
        $region40: #{tpu_custom_call.1} parent=27 // pred_fallthru
          _
      $region28: #{tpu_custom_call.1} parent=5 // pred_fallthru
        _
      %p237 = scmp.le.s32.totalorder 1, %s15
      %p238 = scmp.lt.s32.totalorder %s15, 3
      %p239 = pnand %p237, %p238
      %p240 = pneg %p239
      // Predicated region
      $region41: #{tpu_custom_call.1} parent=5 // pred_check
        _
      $region42: #{tpu_custom_call.1} parent=5 // pred_check_branch
        %242 = sbr.rel (%p239) target = $region44
      $region43: #{tpu_custom_call.1} parent=5 // pred_region
        %s243 = ssub.s32 %s15, 1
        %s244 = smul.u32 16, %s20
        %p245 = scmp.lt.s32.totalorder %s244, 31
        %s246 = scalar_select %p245, %s244, 31
        %s247 = smul.addr %s246, 8
        %s248 = scalar_lea.vmem %s0, %s247
        %p249 = pneg %p41
        %p250 = pneg %p38
        %s251 = smul.u32 16, %s20
        %p252 = scmp.lt.s32.totalorder %s251, 31
        %s253 = scalar_select %p252, %s251, 31
        %s254 = smul.addr %s253, 8
        %s255 = scalar_lea.vmem %s1, %s254
        %p256 = pneg %p67
        %p257 = pneg %p64
        %s258 = smul.u32 16, %s20
        %p259 = scmp.lt.s32.totalorder %s258, 31
        %s260 = scalar_select %p259, %s258, 31
        %s261 = smul.addr %s260, 8
        %s262 = scalar_lea.vmem %s2, %s261
        %p263 = pneg %p93
        %p264 = pneg %p90
        %p265 = pneg %p114
        %p266 = pneg %p111
        %p267 = pneg %p135
        %p268 = pneg %p132
        %p269 = pneg %p156
        %p270 = pneg %p153
        %p271 = pneg %p182
        %p272 = pneg %p179
        %s273 = sand.u32 %s169, 1
        %s274 = scalar_lea.sflag [#allocation3], %s273
        %s275 = sand.u32 %s169, 1
        %s276 = smul.addr %s275, 128
        %s277 = scalar_lea.vmem [#allocation2], %s276
        %s278 = smul.u32 16, %s20
        %p279 = scmp.lt.s32.totalorder %s278, 31
        %s280 = scalar_select %p279, %s278, 31
        %s281 = smul.addr %s280, 8
        %s282 = scalar_lea.vmem %s0, %s281
        %s283 = smul.u32 16, %s20
        %s284 = smul.u32 16, %s20
        %p285 = scmp.lt.s32.totalorder %s284, 31
        %s286 = scalar_select %p285, %s284, 31
        %s287 = smul.addr %s286, 8
        %s288 = scalar_lea.vmem %s1, %s287
        %s289 = smul.u32 16, %s20
        %s290 = smul.u32 16, %s20
        %p291 = scmp.lt.s32.totalorder %s290, 31
        %s292 = scalar_select %p291, %s290, 31
        %s293 = smul.addr %s292, 8
        %s294 = scalar_lea.vmem %s2, %s293
        %s295 = smul.u32 16, %s20
        %s296 = smul.u32 16, %s20
        %v298 = vld [vmem:[%s282] sm:$0xff]
        %v299 = vld [vmem:[%s282 + $0x8] sm:$0xff]
        %v300 = vld [vmem:[%s282 + $0x10] sm:$0xff]
        %v301 = vld [vmem:[%s282 + $0x18] sm:$0xff]
        %v302 = vld [vmem:[%s282 + $0x20] sm:$0xff]
        %v303 = vld [vmem:[%s282 + $0x28] sm:$0xff]
        %v304 = vld [vmem:[%s282 + $0x30] sm:$0xff]
        %v305 = vld [vmem:[%s282 + $0x38] sm:$0xff]
        %v306 = vld [vmem:[%s282 + $0x40] sm:$0xff]
        %v307 = vld [vmem:[%s282 + $0x48] sm:$0xff]
        %v308 = vld [vmem:[%s282 + $0x50] sm:$0xff]
        %v309 = vld [vmem:[%s282 + $0x58] sm:$0xff]
        %v310 = vld [vmem:[%s282 + $0x60] sm:$0xff]
        %v311 = vld [vmem:[%s282 + $0x68] sm:$0xff]
        %v312 = vld [vmem:[%s282 + $0x70] sm:$0xff]
        %v313 = vld [vmem:[%s282 + $0x78] sm:$0xff]
        %v314 = vld [vmem:[%s288] sm:$0xff]
        %v315 = vld [vmem:[%s288 + $0x8] sm:$0xff]
        %v316 = vld [vmem:[%s288 + $0x10] sm:$0xff]
        %v317 = vld [vmem:[%s288 + $0x18] sm:$0xff]
        %v318 = vld [vmem:[%s288 + $0x20] sm:$0xff]
        %v319 = vld [vmem:[%s288 + $0x28] sm:$0xff]
        %v320 = vld [vmem:[%s288 + $0x30] sm:$0xff]
        %v321 = vld [vmem:[%s288 + $0x38] sm:$0xff]
        %v322 = vld [vmem:[%s288 + $0x40] sm:$0xff]
        %v323 = vld [vmem:[%s288 + $0x48] sm:$0xff]
        %v324 = vld [vmem:[%s288 + $0x50] sm:$0xff]
        %v325 = vld [vmem:[%s288 + $0x58] sm:$0xff]
        %v326 = vld [vmem:[%s288 + $0x60] sm:$0xff]
        %v327 = vld [vmem:[%s288 + $0x68] sm:$0xff]
        %v328 = vld [vmem:[%s288 + $0x70] sm:$0xff]
        %v329 = vld [vmem:[%s288 + $0x78] sm:$0xff]
        %v330 = vld [vmem:[%s294] sm:$0xff]
        %v331 = vld [vmem:[%s294 + $0x8] sm:$0xff]
        %v332 = vld [vmem:[%s294 + $0x10] sm:$0xff]
        %v333 = vld [vmem:[%s294 + $0x18] sm:$0xff]
        %v334 = vld [vmem:[%s294 + $0x20] sm:$0xff]
        %v335 = vld [vmem:[%s294 + $0x28] sm:$0xff]
        %v336 = vld [vmem:[%s294 + $0x30] sm:$0xff]
        %v337 = vld [vmem:[%s294 + $0x38] sm:$0xff]
        %v338 = vld [vmem:[%s294 + $0x40] sm:$0xff]
        %v339 = vld [vmem:[%s294 + $0x48] sm:$0xff]
        %v340 = vld [vmem:[%s294 + $0x50] sm:$0xff]
        %v341 = vld [vmem:[%s294 + $0x58] sm:$0xff]
        %v342 = vld [vmem:[%s294 + $0x60] sm:$0xff]
        %v343 = vld [vmem:[%s294 + $0x68] sm:$0xff]
        %v344 = vld [vmem:[%s294 + $0x70] sm:$0xff]
        %v345 = vld [vmem:[%s294 + $0x78] sm:$0xff]
        %v346 = vld [vmem:[%s3] sm:$0xff]
        %v347 = vld [vmem:[%s3 + $0x8] sm:$0xf]
        %v348 = vld [vmem:[%s3 + $0x10] sm:$0xff]
        %v349 = vld [vmem:[%s3 + $0x18] sm:$0x7]
        %v350 = vld [vmem:[%s4] sm:$0xff]
        %v351 = vld [vmem:[%s4 + $0x8] sm:$0xff]
        %v352 = vld [vmem:[%s4 + $0x10] sm:$0xff]
        %v353 = vld [vmem:[%s4 + $0x18] sm:$0xff]
        %v354 = vld [vmem:[%s5] sm:$0x1]
        %v355 = vpack.c.bf16 %v299, %v298
        %v356 = vpack.c.bf16 %v301, %v300
        %v357 = vpack.c.bf16 %v303, %v302
        %v358 = vpack.c.bf16 %v305, %v304
        %v359 = vpack.c.bf16 %v307, %v306
        %v360 = vpack.c.bf16 %v309, %v308
        %v361 = vpack.c.bf16 %v311, %v310
        %v362 = vpack.c.bf16 %v313, %v312
        %v363 = vpack.c.bf16 %v347, %v346
        %v365 = vlaneseq
        %v366 = vshrl.u32 %v365, 7
        %v367 = vsub.s32 0, %v366
        %v368 = vrot.slane %v354, %v367
        %vm370 = vcmask 97280
        %v372 = vsel %vm370, %v355, 0
        %v375 = vsel %vm370, %v356, 0
        %v378 = vsel %vm370, %v357, 0
        %v381 = vsel %vm370, %v358, 0
        %v384 = vsel %vm370, %v359, 0
        %v387 = vsel %vm370, %v360, 0
        %v390 = vsel %vm370, %v361, 0
        %v393 = vsel %vm370, %v362, 0
        %vm395 = vcmask 1045504
        %v397 = vsel %vm395, %v363, 0
        %399 = vmatprep.subr.bf16.mxu0 0
        %400 = vmatpush1.bf16.msra.mxu0 %v397
        %401 = vmatprep.subr.bf16.mxu0 0
        %402 = vmatpush1.bf16.msra.mxu0 0
        %403 = vmatprep.subr.bf16.mxu0 0
        %404 = vmatpush1.bf16.msra.mxu0 0
        %405 = vmatprep.subr.bf16.mxu0 0
        %406 = vmatpush1.bf16.msra.mxu0 0
        %407 = vmatprep.subr.bf16.mxu0 0
        %408 = vmatpush1.bf16.msra.mxu0 0
        %409 = vmatprep.subr.bf16.mxu0 0
        %410 = vmatpush1.bf16.msra.mxu0 0
        %411 = vmatprep.subr.bf16.mxu0 0
        %412 = vmatpush1.bf16.msra.mxu0 0
        %413 = vmatprep.subr.bf16.mxu0 0
        %414 = vmatpush1.bf16.msra.mxu0 0
        %415 = vmatprep.subr.bf16.mxu0 0
        %416 = vmatpush1.bf16.msra.mxu0 0
        %417 = vmatprep.subr.bf16.mxu0 0
        %418 = vmatpush1.bf16.msra.mxu0 0
        %419 = vmatprep.subr.bf16.mxu0 0
        %420 = vmatpush1.bf16.msra.mxu0 0
        %421 = vmatprep.subr.bf16.mxu0 0
        %422 = vmatpush1.bf16.msra.mxu0 0
        %423 = vmatprep.subr.bf16.mxu0 0
        %424 = vmatpush1.bf16.msra.mxu0 0
        %425 = vmatprep.subr.bf16.mxu0 0
        %426 = vmatpush1.bf16.msra.mxu0 0
        %427 = vmatprep.subr.bf16.mxu0 0
        %428 = vmatpush1.bf16.msra.mxu0 0
        %429 = vmatprep.subr.bf16.mxu0 0
        %430 = vmatpush1.bf16.msra.mxu0 0
        %431 = vmatprep.mubr.bf16.mxu0 0
        %432 = vmatmul.mubr.bf16.gmra.mrb[0].mxu0 %v372
        %v433 = vpop.f32.mrb[0].mxu0
        %v434 = vadd.f32 %v368, %v433
        %v435 = vpop.f32.mrb[0].mxu0
        %v436 = vpop.f32.mrb[0].mxu0
        %v437 = vadd.f32 %v368, %v436
        %v438 = vpop.f32.mrb[0].mxu0
        %439 = vmatprep.mubr.bf16.mxu0 0
        %440 = vmatmul.mubr.bf16.gmra.mrb[0].mxu0 %v375
        %v441 = vpop.f32.mrb[0].mxu0
        %v442 = vadd.f32 %v368, %v441
        %v443 = vpop.f32.mrb[0].mxu0
        %v444 = vpop.f32.mrb[0].mxu0
        %v445 = vadd.f32 %v368, %v444
        %v446 = vpop.f32.mrb[0].mxu0
        %447 = vmatprep.mubr.bf16.mxu0 0
        %448 = vmatmul.mubr.bf16.gmra.mrb[0].mxu0 %v378
        %v449 = vpop.f32.mrb[0].mxu0
        %v450 = vadd.f32 %v368, %v449
        %v451 = vpop.f32.mrb[0].mxu0
        %v452 = vpop.f32.mrb[0].mxu0
        %v453 = vadd.f32 %v368, %v452
        %v454 = vpop.f32.mrb[0].mxu0
        %455 = vmatprep.mubr.bf16.mxu0 0
        %456 = vmatmul.mubr.bf16.gmra.mrb[0].mxu0 %v381
        %v457 = vpop.f32.mrb[0].mxu0
        %v458 = vadd.f32 %v368, %v457
        %v459 = vpop.f32.mrb[0].mxu0
        %v460 = vpop.f32.mrb[0].mxu0
        %v461 = vadd.f32 %v368, %v460
        %v462 = vpop.f32.mrb[0].mxu0
        %463 = vmatprep.mubr.bf16.mxu0 0
        %464 = vmatmul.mubr.bf16.gmra.mrb[0].mxu0 %v384
        %v465 = vpop.f32.mrb[0].mxu0
        %v466 = vadd.f32 %v368, %v465
        %v467 = vpop.f32.mrb[0].mxu0
        %v468 = vpop.f32.mrb[0].mxu0
        %v469 = vadd.f32 %v368, %v468
        %v470 = vpop.f32.mrb[0].mxu0
        %471 = vmatprep.mubr.bf16.mxu0 0
        %472 = vmatmul.mubr.bf16.gmra.mrb[0].mxu0 %v387
        %v473 = vpop.f32.mrb[0].mxu0
        %v474 = vadd.f32 %v368, %v473
        %v475 = vpop.f32.mrb[0].mxu0
        %v476 = vpop.f32.mrb[0].mxu0
        %v477 = vadd.f32 %v368, %v476
        %v478 = vpop.f32.mrb[0].mxu0
        %479 = vmatprep.mubr.bf16.mxu0 0
        %480 = vmatmul.mubr.bf16.gmra.mrb[0].mxu0 %v390
        %v481 = vpop.f32.mrb[0].mxu0
        %v482 = vadd.f32 %v368, %v481
        %v483 = vpop.f32.mrb[0].mxu0
        %v484 = vpop.f32.mrb[0].mxu0
        %v485 = vadd.f32 %v368, %v484
        %v486 = vpop.f32.mrb[0].mxu0
        %487 = vmatprep.mubr.bf16.mxu0 0
        %488 = vmatmul.mubr.bf16.gmra.mrb[0].mxu0 %v393
        %v489 = vpop.f32.mrb[0].mxu0
        %v490 = vadd.f32 %v368, %v489
        %v491 = vpop.f32.mrb[0].mxu0
        %v492 = vpop.f32.mrb[0].mxu0
        %v493 = vadd.f32 %v368, %v492
        %v494 = vpop.f32.mrb[0].mxu0
        %495 = vdwg.mxu0
        %v496 = vmax.f32 %v434, 0.0
        %v497 = vmax.f32 %v437, 0.0
        %v498 = vmax.f32 %v442, 0.0
        %v499 = vmax.f32 %v445, 0.0
        %v500 = vmax.f32 %v450, 0.0
        %v501 = vmax.f32 %v453, 0.0
        %v502 = vmax.f32 %v458, 0.0
        %v503 = vmax.f32 %v461, 0.0
        %v504 = vmax.f32 %v466, 0.0
        %v505 = vmax.f32 %v469, 0.0
        %v506 = vmax.f32 %v474, 0.0
        %v507 = vmax.f32 %v477, 0.0
        %v508 = vmax.f32 %v482, 0.0
        %v509 = vmax.f32 %v485, 0.0
        %v510 = vmax.f32 %v490, 0.0
        %v511 = vmax.f32 %v493, 0.0
        %v512 = vpack.c.bf16 %v497, %v496
        %v513 = vpack.c.bf16 %v499, %v498
        %v514 = vpack.c.bf16 %v501, %v500
        %v515 = vpack.c.bf16 %v503, %v502
        %v516 = vpack.c.bf16 %v505, %v504
        %v517 = vpack.c.bf16 %v507, %v506
        %v518 = vpack.c.bf16 %v509, %v508
        %v519 = vpack.c.bf16 %v511, %v510
        %v520 = vpack.c.bf16 %v351, %v350
        %v521 = vpack.c.bf16 %v353, %v352
        %522 = vrot.lane.b32.xlu0 %v368, 96
        %v523 = vpop.permute.xlu0 %522
        %vm525 = vcmask 261120
        %v527 = vsel %vm525, %v512, 0
        %v530 = vsel %vm525, %v513, 0
        %v533 = vsel %vm525, %v514, 0
        %v536 = vsel %vm525, %v515, 0
        %v539 = vsel %vm525, %v516, 0
        %v542 = vsel %vm525, %v517, 0
        %v545 = vsel %vm525, %v518, 0
        %v548 = vsel %vm525, %v519, 0
        %550 = vmatprep.subr.bf16.mxu0 0
        %551 = vmatpush1.bf16.msra.mxu0 %v520
        %552 = vmatprep.subr.bf16.mxu0 0
        %553 = vmatpush1.bf16.msra.mxu0 %v521
        %554 = vmatprep.subr.bf16.mxu0 0
        %555 = vmatpush1.bf16.msra.mxu0 0
        %556 = vmatprep.subr.bf16.mxu0 0
        %557 = vmatpush1.bf16.msra.mxu0 0
        %558 = vmatprep.subr.bf16.mxu0 0
        %559 = vmatpush1.bf16.msra.mxu0 0
        %560 = vmatprep.subr.bf16.mxu0 0
        %561 = vmatpush1.bf16.msra.mxu0 0
        %562 = vmatprep.subr.bf16.mxu0 0
        %563 = vmatpush1.bf16.msra.mxu0 0
        %564 = vmatprep.subr.bf16.mxu0 0
        %565 = vmatpush1.bf16.msra.mxu0 0
        %566 = vmatprep.subr.bf16.mxu0 0
        %567 = vmatpush1.bf16.msra.mxu0 0
        %568 = vmatprep.subr.bf16.mxu0 0
        %569 = vmatpush1.bf16.msra.mxu0 0
        %570 = vmatprep.subr.bf16.mxu0 0
        %571 = vmatpush1.bf16.msra.mxu0 0
        %572 = vmatprep.subr.bf16.mxu0 0
        %573 = vmatpush1.bf16.msra.mxu0 0
        %574 = vmatprep.subr.bf16.mxu0 0
        %575 = vmatpush1.bf16.msra.mxu0 0
        %576 = vmatprep.subr.bf16.mxu0 0
        %577 = vmatpush1.bf16.msra.mxu0 0
        %578 = vmatprep.subr.bf16.mxu0 0
        %579 = vmatpush1.bf16.msra.mxu0 0
        %580 = vmatprep.subr.bf16.mxu0 0
        %581 = vmatpush1.bf16.msra.mxu0 0
        %582 = vmatprep.mubr.bf16.mxu0 0
        %583 = vmatmul.mubr.bf16.gmra.mrb[0].mxu0 %v527
        %v584 = vpop.f32.mrb[0].mxu0
        %v585 = vadd.f32 %v523, %v584
        %v586 = vpop.f32.mrb[0].mxu0
        %v587 = vpop.f32.mrb[0].mxu0
        %v588 = vadd.f32 %v523, %v587
        %v589 = vpop.f32.mrb[0].mxu0
        %590 = vmatprep.mubr.bf16.mxu0 0
        %591 = vmatmul.mubr.bf16.gmra.mrb[0].mxu0 %v530
        %v592 = vpop.f32.mrb[0].mxu0
        %v593 = vadd.f32 %v523, %v592
        %v594 = vpop.f32.mrb[0].mxu0
        %v595 = vpop.f32.mrb[0].mxu0
        %v596 = vadd.f32 %v523, %v595
        %v597 = vpop.f32.mrb[0].mxu0
        %598 = vmatprep.mubr.bf16.mxu0 0
        %599 = vmatmul.mubr.bf16.gmra.mrb[0].mxu0 %v533
        %v600 = vpop.f32.mrb[0].mxu0
        %v601 = vadd.f32 %v523, %v600
        %v602 = vpop.f32.mrb[0].mxu0
        %v603 = vpop.f32.mrb[0].mxu0
        %v604 = vadd.f32 %v523, %v603
        %v605 = vpop.f32.mrb[0].mxu0
        %606 = vmatprep.mubr.bf16.mxu0 0
        %607 = vmatmul.mubr.bf16.gmra.mrb[0].mxu0 %v536
        %v608 = vpop.f32.mrb[0].mxu0
        %v609 = vadd.f32 %v523, %v608
        %v610 = vpop.f32.mrb[0].mxu0
        %v611 = vpop.f32.mrb[0].mxu0
        %v612 = vadd.f32 %v523, %v611
        %v613 = vpop.f32.mrb[0].mxu0
        %614 = vmatprep.mubr.bf16.mxu0 0
        %615 = vmatmul.mubr.bf16.gmra.mrb[0].mxu0 %v539
        %v616 = vpop.f32.mrb[0].mxu0
        %v617 = vadd.f32 %v523, %v616
        %v618 = vpop.f32.mrb[0].mxu0
        %v619 = vpop.f32.mrb[0].mxu0
        %v620 = vadd.f32 %v523, %v619
        %v621 = vpop.f32.mrb[0].mxu0
        %622 = vmatprep.mubr.bf16.mxu0 0
        %623 = vmatmul.mubr.bf16.gmra.mrb[0].mxu0 %v542
        %v624 = vpop.f32.mrb[0].mxu0
        %v625 = vadd.f32 %v523, %v624
        %v626 = vpop.f32.mrb[0].mxu0
        %v627 = vpop.f32.mrb[0].mxu0
        %v628 = vadd.f32 %v523, %v627
        %v629 = vpop.f32.mrb[0].mxu0
        %630 = vmatprep.mubr.bf16.mxu0 0
        %631 = vmatmul.mubr.bf16.gmra.mrb[0].mxu0 %v545
        %v632 = vpop.f32.mrb[0].mxu0
        %v633 = vadd.f32 %v523, %v632
        %v634 = vpop.f32.mrb[0].mxu0
        %v635 = vpop.f32.mrb[0].mxu0
        %v636 = vadd.f32 %v523, %v635
        %v637 = vpop.f32.mrb[0].mxu0
        %638 = vmatprep.mubr.bf16.mxu0 0
        %639 = vmatmul.mubr.bf16.gmra.mrb[0].mxu0 %v548
        %v640 = vpop.f32.mrb[0].mxu0
        %v641 = vadd.f32 %v523, %v640
        %v642 = vpop.f32.mrb[0].mxu0
        %v643 = vpop.f32.mrb[0].mxu0
        %v644 = vadd.f32 %v523, %v643
        %v645 = vpop.f32.mrb[0].mxu0
        %646 = vdwg.mxu0
        %v647 = vmul.f32 %v585, 0.5
        %v648 = vmul.f32 %v588, 0.5
        %v649 = vmul.f32 %v593, 0.5
        %v650 = vmul.f32 %v596, 0.5
        %v651 = vmul.f32 %v601, 0.5
        %v652 = vmul.f32 %v604, 0.5
        %v653 = vmul.f32 %v609, 0.5
        %v654 = vmul.f32 %v612, 0.5
        %v655 = vmul.f32 %v617, 0.5
        %v656 = vmul.f32 %v620, 0.5
        %v657 = vmul.f32 %v625, 0.5
        %v658 = vmul.f32 %v628, 0.5
        %v659 = vmul.f32 %v633, 0.5
        %v660 = vmul.f32 %v636, 0.5
        %v661 = vmul.f32 %v641, 0.5
        %v662 = vmul.f32 %v644, 0.5
        %v663 = vmul.f32 %v647, 1.442695
        %v664 = vpow.pop %v663
        %v665 = vmul.f32 %v648, 1.442695
        %v666 = vpow.pop %v665
        %v667 = vmul.f32 %v649, 1.442695
        %v668 = vpow.pop %v667
        %v669 = vmul.f32 %v650, 1.442695
        %v670 = vpow.pop %v669
        %v671 = vmul.f32 %v651, 1.442695
        %v672 = vpow.pop %v671
        %v673 = vmul.f32 %v652, 1.442695
        %v674 = vpow.pop %v673
        %v675 = vmul.f32 %v653, 1.442695
        %v676 = vpow.pop %v675
        %v677 = vmul.f32 %v654, 1.442695
        %v678 = vpow.pop %v677
        %v679 = vmul.f32 %v655, 1.442695
        %v680 = vpow.pop %v679
        %v681 = vmul.f32 %v656, 1.442695
        %v682 = vpow.pop %v681
        %v683 = vmul.f32 %v657, 1.442695
        %v684 = vpow.pop %v683
        %v685 = vmul.f32 %v658, 1.442695
        %v686 = vpow.pop %v685
        %v687 = vmul.f32 %v659, 1.442695
        %v688 = vpow.pop %v687
        %v689 = vmul.f32 %v660, 1.442695
        %v690 = vpow.pop %v689
        %v691 = vmul.f32 %v661, 1.442695
        %v692 = vpow.pop %v691
        %v693 = vmul.f32 %v662, 1.442695
        %v694 = vpow.pop %v693
        %711 = vrot.lane.b32.xlu0 %v330, 8
        %v712 = vpop.permute.xlu0 %711
        %713 = vrot.lane.b32.xlu0 %v331, 8
        %v714 = vpop.permute.xlu0 %713
        %715 = vrot.lane.b32.xlu0 %v332, 8
        %v716 = vpop.permute.xlu0 %715
        %717 = vrot.lane.b32.xlu0 %v333, 8
        %v718 = vpop.permute.xlu0 %717
        %719 = vrot.lane.b32.xlu0 %v334, 8
        %v720 = vpop.permute.xlu0 %719
        %721 = vrot.lane.b32.xlu0 %v335, 8
        %v722 = vpop.permute.xlu0 %721
        %723 = vrot.lane.b32.xlu0 %v336, 8
        %v724 = vpop.permute.xlu0 %723
        %725 = vrot.lane.b32.xlu0 %v337, 8
        %v726 = vpop.permute.xlu0 %725
        %727 = vrot.lane.b32.xlu0 %v338, 8
        %v728 = vpop.permute.xlu0 %727
        %729 = vrot.lane.b32.xlu0 %v339, 8
        %v730 = vpop.permute.xlu0 %729
        %731 = vrot.lane.b32.xlu0 %v340, 8
        %v732 = vpop.permute.xlu0 %731
        %733 = vrot.lane.b32.xlu0 %v341, 8
        %v734 = vpop.permute.xlu0 %733
        %735 = vrot.lane.b32.xlu0 %v342, 8
        %v736 = vpop.permute.xlu0 %735
        %737 = vrot.lane.b32.xlu0 %v343, 8
        %v738 = vpop.permute.xlu0 %737
        %739 = vrot.lane.b32.xlu0 %v344, 8
        %v740 = vpop.permute.xlu0 %739
        %741 = vrot.lane.b32.xlu0 %v345, 8
        %v742 = vpop.permute.xlu0 %741
        %v759 = vmul.f32 %v664, %v712
        %v760 = vmul.f32 %v666, %v714
        %v761 = vmul.f32 %v668, %v716
        %v762 = vmul.f32 %v670, %v718
        %v763 = vmul.f32 %v672, %v720
        %v764 = vmul.f32 %v674, %v722
        %v765 = vmul.f32 %v676, %v724
        %v766 = vmul.f32 %v678, %v726
        %v767 = vmul.f32 %v680, %v728
        %v768 = vmul.f32 %v682, %v730
        %v769 = vmul.f32 %v684, %v732
        %v770 = vmul.f32 %v686, %v734
        %v771 = vmul.f32 %v688, %v736
        %v772 = vmul.f32 %v690, %v738
        %v773 = vmul.f32 %v692, %v740
        %v774 = vmul.f32 %v694, %v742
        %791 = vrot.lane.b32.xlu0 %v759, 120
        %v792 = vpop.permute.xlu0 %791
        %793 = vrot.lane.b32.xlu0 %v760, 120
        %v794 = vpop.permute.xlu0 %793
        %795 = vrot.lane.b32.xlu0 %v761, 120
        %v796 = vpop.permute.xlu0 %795
        %797 = vrot.lane.b32.xlu0 %v762, 120
        %v798 = vpop.permute.xlu0 %797
        %799 = vrot.lane.b32.xlu0 %v763, 120
        %v800 = vpop.permute.xlu0 %799
        %801 = vrot.lane.b32.xlu0 %v764, 120
        %v802 = vpop.permute.xlu0 %801
        %803 = vrot.lane.b32.xlu0 %v765, 120
        %v804 = vpop.permute.xlu0 %803
        %805 = vrot.lane.b32.xlu0 %v766, 120
        %v806 = vpop.permute.xlu0 %805
        %807 = vrot.lane.b32.xlu0 %v767, 120
        %v808 = vpop.permute.xlu0 %807
        %809 = vrot.lane.b32.xlu0 %v768, 120
        %v810 = vpop.permute.xlu0 %809
        %811 = vrot.lane.b32.xlu0 %v769, 120
        %v812 = vpop.permute.xlu0 %811
        %813 = vrot.lane.b32.xlu0 %v770, 120
        %v814 = vpop.permute.xlu0 %813
        %815 = vrot.lane.b32.xlu0 %v771, 120
        %v816 = vpop.permute.xlu0 %815
        %817 = vrot.lane.b32.xlu0 %v772, 120
        %v818 = vpop.permute.xlu0 %817
        %819 = vrot.lane.b32.xlu0 %v773, 120
        %v820 = vpop.permute.xlu0 %819
        %821 = vrot.lane.b32.xlu0 %v774, 120
        %v822 = vpop.permute.xlu0 %821
        %v839 = vadd.f32 %v585, %v792
        %v840 = vadd.f32 %v588, %v794
        %v841 = vadd.f32 %v593, %v796
        %v842 = vadd.f32 %v596, %v798
        %v843 = vadd.f32 %v601, %v800
        %v844 = vadd.f32 %v604, %v802
        %v845 = vadd.f32 %v609, %v804
        %v846 = vadd.f32 %v612, %v806
        %v847 = vadd.f32 %v617, %v808
        %v848 = vadd.f32 %v620, %v810
        %v849 = vadd.f32 %v625, %v812
        %v850 = vadd.f32 %v628, %v814
        %v851 = vadd.f32 %v633, %v816
        %v852 = vadd.f32 %v636, %v818
        %v853 = vadd.f32 %v641, %v820
        %v854 = vadd.f32 %v644, %v822
        %v855 = vpack.c.bf16 %v840, %v839
        %v856 = vpack.c.bf16 %v842, %v841
        %v857 = vpack.c.bf16 %v844, %v843
        %v858 = vpack.c.bf16 %v846, %v845
        %v859 = vpack.c.bf16 %v848, %v847
        %v860 = vpack.c.bf16 %v850, %v849
        %v861 = vpack.c.bf16 %v852, %v851
        %v862 = vpack.c.bf16 %v854, %v853
        %v863 = vpack.c.bf16 %v348, %v348
        %v864 = vpack.c.bf16 %v315, %v314
        %v865 = vpack.c.bf16 %v317, %v316
        %v866 = vpack.c.bf16 %v319, %v318
        %v867 = vpack.c.bf16 %v321, %v320
        %v868 = vpack.c.bf16 %v323, %v322
        %v869 = vpack.c.bf16 %v325, %v324
        %v870 = vpack.c.bf16 %v327, %v326
        %v871 = vpack.c.bf16 %v329, %v328
        %v872 = vpack.c.bf16 %v349, %v349
        %vm873 = vcmask 23552
        %v875 = vsel %vm873, %v864, 0
        %v878 = vsel %vm873, %v865, 0
        %v881 = vsel %vm873, %v866, 0
        %v884 = vsel %vm873, %v867, 0
        %v887 = vsel %vm873, %v868, 0
        %v890 = vsel %vm873, %v869, 0
        %v893 = vsel %vm873, %v870, 0
        %v896 = vsel %vm873, %v871, 0
        %vm898 = vcmask 1040384
        %vm899 = vcmask 1041408
        %v900 = vsel %vm898, 4294967295, 65535
        %v901 = vsel %vm899, %v900, 0
        %v903 = vand.u32 %v872, %v901
        %905 = vmatprep.subr.bf16.mxu0 0
        %906 = vmatpush1.bf16.msra.mxu0 %v903
        %907 = vmatprep.subr.bf16.mxu0 0
        %908 = vmatpush1.bf16.msra.mxu0 0
        %909 = vmatprep.subr.bf16.mxu0 0
        %910 = vmatpush1.bf16.msra.mxu0 0
        %911 = vmatprep.subr.bf16.mxu0 0
        %912 = vmatpush1.bf16.msra.mxu0 0
        %913 = vmatprep.subr.bf16.mxu0 0
        %914 = vmatpush1.bf16.msra.mxu0 0
        %915 = vmatprep.subr.bf16.mxu0 0
        %916 = vmatpush1.bf16.msra.mxu0 0
        %917 = vmatprep.subr.bf16.mxu0 0
        %918 = vmatpush1.bf16.msra.mxu0 0
        %919 = vmatprep.subr.bf16.mxu0 0
        %920 = vmatpush1.bf16.msra.mxu0 0
        %921 = vmatprep.subr.bf16.mxu0 0
        %922 = vmatpush1.bf16.msra.mxu0 0
        %923 = vmatprep.subr.bf16.mxu0 0
        %924 = vmatpush1.bf16.msra.mxu0 0
        %925 = vmatprep.subr.bf16.mxu0 0
        %926 = vmatpush1.bf16.msra.mxu0 0
        %927 = vmatprep.subr.bf16.mxu0 0
        %928 = vmatpush1.bf16.msra.mxu0 0
        %929 = vmatprep.subr.bf16.mxu0 0
        %930 = vmatpush1.bf16.msra.mxu0 0
        %931 = vmatprep.subr.bf16.mxu0 0
        %932 = vmatpush1.bf16.msra.mxu0 0
        %933 = vmatprep.subr.bf16.mxu0 0
        %934 = vmatpush1.bf16.msra.mxu0 0
        %935 = vmatprep.subr.bf16.mxu0 0
        %936 = vmatpush1.bf16.msra.mxu0 0
        %937 = vmatprep.mubr.bf16.mxu0 0
        %938 = vmatmul.mubr.bf16.gmra.mrb[0].mxu0 %v875
        %v939 = vpop.f32.mrb[0].mxu0
        %v940 = vadd.f32 0.0, %v939
        %v941 = vpop.f32.mrb[0].mxu0
        %v942 = vpop.f32.mrb[0].mxu0
        %v943 = vadd.f32 0.0, %v942
        %v944 = vpop.f32.mrb[0].mxu0
        %945 = vmatprep.mubr.bf16.mxu0 0
        %946 = vmatmul.mubr.bf16.gmra.mrb[0].mxu0 %v878
        %v947 = vpop.f32.mrb[0].mxu0
        %v948 = vadd.f32 0.0, %v947
        %v949 = vpop.f32.mrb[0].mxu0
        %v950 = vpop.f32.mrb[0].mxu0
        %v951 = vadd.f32 0.0, %v950
        %v952 = vpop.f32.mrb[0].mxu0
        %953 = vmatprep.mubr.bf16.mxu0 0
        %954 = vmatmul.mubr.bf16.gmra.mrb[0].mxu0 %v881
        %v955 = vpop.f32.mrb[0].mxu0
        %v956 = vadd.f32 0.0, %v955
        %v957 = vpop.f32.mrb[0].mxu0
        %v958 = vpop.f32.mrb[0].mxu0
        %v959 = vadd.f32 0.0, %v958
        %v960 = vpop.f32.mrb[0].mxu0
        %961 = vmatprep.mubr.bf16.mxu0 0
        %962 = vmatmul.mubr.bf16.gmra.mrb[0].mxu0 %v884
        %v963 = vpop.f32.mrb[0].mxu0
        %v964 = vadd.f32 0.0, %v963
        %v965 = vpop.f32.mrb[0].mxu0
        %v966 = vpop.f32.mrb[0].mxu0
        %v967 = vadd.f32 0.0, %v966
        %v968 = vpop.f32.mrb[0].mxu0
        %969 = vmatprep.mubr.bf16.mxu0 0
        %970 = vmatmul.mubr.bf16.gmra.mrb[0].mxu0 %v887
        %v971 = vpop.f32.mrb[0].mxu0
        %v972 = vadd.f32 0.0, %v971
        %v973 = vpop.f32.mrb[0].mxu0
        %v974 = vpop.f32.mrb[0].mxu0
        %v975 = vadd.f32 0.0, %v974
        %v976 = vpop.f32.mrb[0].mxu0
        %977 = vmatprep.mubr.bf16.mxu0 0
        %978 = vmatmul.mubr.bf16.gmra.mrb[0].mxu0 %v890
        %v979 = vpop.f32.mrb[0].mxu0
        %v980 = vadd.f32 0.0, %v979
        %v981 = vpop.f32.mrb[0].mxu0
        %v982 = vpop.f32.mrb[0].mxu0
        %v983 = vadd.f32 0.0, %v982
        %v984 = vpop.f32.mrb[0].mxu0
        %985 = vmatprep.mubr.bf16.mxu0 0
        %986 = vmatmul.mubr.bf16.gmra.mrb[0].mxu0 %v893
        %v987 = vpop.f32.mrb[0].mxu0
        %v988 = vadd.f32 0.0, %v987
        %v989 = vpop.f32.mrb[0].mxu0
        %v990 = vpop.f32.mrb[0].mxu0
        %v991 = vadd.f32 0.0, %v990
        %v992 = vpop.f32.mrb[0].mxu0
        %993 = vmatprep.mubr.bf16.mxu0 0
        %994 = vmatmul.mubr.bf16.gmra.mrb[0].mxu0 %v896
        %v995 = vpop.f32.mrb[0].mxu0
        %v996 = vadd.f32 0.0, %v995
        %v997 = vpop.f32.mrb[0].mxu0
        %v998 = vpop.f32.mrb[0].mxu0
        %v999 = vadd.f32 0.0, %v998
        %v1000 = vpop.f32.mrb[0].mxu0
        %1001 = vdwg.mxu0
        %vm1002 = vcmask 64512
        %v1004 = vsel %vm1002, %v855, 0
        %v1007 = vsel %vm1002, %v856, 0
        %v1010 = vsel %vm1002, %v857, 0
        %v1013 = vsel %vm1002, %v858, 0
        %v1016 = vsel %vm1002, %v859, 0
        %v1019 = vsel %vm1002, %v860, 0
        %v1022 = vsel %vm1002, %v861, 0
        %v1025 = vsel %vm1002, %v862, 0
        %vm1027 = vcmask 1043456
        %v1029 = vsel %vm1027, %v863, 0
        %1031 = vmatprep.subr.bf16.mxu0 0
        %1032 = vmatpush1.bf16.msra.mxu0 %v1029
        %1033 = vmatprep.subr.bf16.mxu0 0
        %1034 = vmatpush1.bf16.msra.mxu0 0
        %1035 = vmatprep.subr.bf16.mxu0 0
        %1036 = vmatpush1.bf16.msra.mxu0 0
        %1037 = vmatprep.subr.bf16.mxu0 0
        %1038 = vmatpush1.bf16.msra.mxu0 0
        %1039 = vmatprep.subr.bf16.mxu0 0
        %1040 = vmatpush1.bf16.msra.mxu0 0
        %1041 = vmatprep.subr.bf16.mxu0 0
        %1042 = vmatpush1.bf16.msra.mxu0 0
        %1043 = vmatprep.subr.bf16.mxu0 0
        %1044 = vmatpush1.bf16.msra.mxu0 0
        %1045 = vmatprep.subr.bf16.mxu0 0
        %1046 = vmatpush1.bf16.msra.mxu0 0
        %1047 = vmatprep.subr.bf16.mxu0 0
        %1048 = vmatpush1.bf16.msra.mxu0 0
        %1049 = vmatprep.subr.bf16.mxu0 0
        %1050 = vmatpush1.bf16.msra.mxu0 0
        %1051 = vmatprep.subr.bf16.mxu0 0
        %1052 = vmatpush1.bf16.msra.mxu0 0
        %1053 = vmatprep.subr.bf16.mxu0 0
        %1054 = vmatpush1.bf16.msra.mxu0 0
        %1055 = vmatprep.subr.bf16.mxu0 0
        %1056 = vmatpush1.bf16.msra.mxu0 0
        %1057 = vmatprep.subr.bf16.mxu0 0
        %1058 = vmatpush1.bf16.msra.mxu0 0
        %1059 = vmatprep.subr.bf16.mxu0 0
        %1060 = vmatpush1.bf16.msra.mxu0 0
        %1061 = vmatprep.subr.bf16.mxu0 0
        %1062 = vmatpush1.bf16.msra.mxu0 0
        %1063 = vmatprep.mubr.bf16.mxu0 0
        %1064 = vmatmul.mubr.bf16.gmra.mrb[0].mxu0 %v1004
        %v1065 = vpop.f32.mrb[0].mxu0
        %v1066 = vadd.f32 %v940, %v1065
        %v1067 = vpop.f32.mrb[0].mxu0
        %v1068 = vpop.f32.mrb[0].mxu0
        %v1069 = vadd.f32 %v943, %v1068
        %v1070 = vpop.f32.mrb[0].mxu0
        %1071 = vmatprep.mubr.bf16.mxu0 0
        %1072 = vmatmul.mubr.bf16.gmra.mrb[0].mxu0 %v1007
        %v1073 = vpop.f32.mrb[0].mxu0
        %v1074 = vadd.f32 %v948, %v1073
        %v1075 = vpop.f32.mrb[0].mxu0
        %v1076 = vpop.f32.mrb[0].mxu0
        %v1077 = vadd.f32 %v951, %v1076
        %v1078 = vpop.f32.mrb[0].mxu0
        %1079 = vmatprep.mubr.bf16.mxu0 0
        %1080 = vmatmul.mubr.bf16.gmra.mrb[0].mxu0 %v1010
        %v1081 = vpop.f32.mrb[0].mxu0
        %v1082 = vadd.f32 %v956, %v1081
        %v1083 = vpop.f32.mrb[0].mxu0
        %v1084 = vpop.f32.mrb[0].mxu0
        %v1085 = vadd.f32 %v959, %v1084
        %v1086 = vpop.f32.mrb[0].mxu0
        %1087 = vmatprep.mubr.bf16.mxu0 0
        %1088 = vmatmul.mubr.bf16.gmra.mrb[0].mxu0 %v1013
        %v1089 = vpop.f32.mrb[0].mxu0
        %v1090 = vadd.f32 %v964, %v1089
        %v1091 = vpop.f32.mrb[0].mxu0
        %v1092 = vpop.f32.mrb[0].mxu0
        %v1093 = vadd.f32 %v967, %v1092
        %v1094 = vpop.f32.mrb[0].mxu0
        %1095 = vmatprep.mubr.bf16.mxu0 0
        %1096 = vmatmul.mubr.bf16.gmra.mrb[0].mxu0 %v1016
        %v1097 = vpop.f32.mrb[0].mxu0
        %v1098 = vadd.f32 %v972, %v1097
        %v1099 = vpop.f32.mrb[0].mxu0
        %v1100 = vpop.f32.mrb[0].mxu0
        %v1101 = vadd.f32 %v975, %v1100
        %v1102 = vpop.f32.mrb[0].mxu0
        %1103 = vmatprep.mubr.bf16.mxu0 0
        %1104 = vmatmul.mubr.bf16.gmra.mrb[0].mxu0 %v1019
        %v1105 = vpop.f32.mrb[0].mxu0
        %v1106 = vadd.f32 %v980, %v1105
        %v1107 = vpop.f32.mrb[0].mxu0
        %v1108 = vpop.f32.mrb[0].mxu0
        %v1109 = vadd.f32 %v983, %v1108
        %v1110 = vpop.f32.mrb[0].mxu0
        %1111 = vmatprep.mubr.bf16.mxu0 0
        %1112 = vmatmul.mubr.bf16.gmra.mrb[0].mxu0 %v1022
        %v1113 = vpop.f32.mrb[0].mxu0
        %v1114 = vadd.f32 %v988, %v1113
        %v1115 = vpop.f32.mrb[0].mxu0
        %v1116 = vpop.f32.mrb[0].mxu0
        %v1117 = vadd.f32 %v991, %v1116
        %v1118 = vpop.f32.mrb[0].mxu0
        %1119 = vmatprep.mubr.bf16.mxu0 0
        %1120 = vmatmul.mubr.bf16.gmra.mrb[0].mxu0 %v1025
        %v1121 = vpop.f32.mrb[0].mxu0
        %v1122 = vadd.f32 %v996, %v1121
        %v1123 = vpop.f32.mrb[0].mxu0
        %v1124 = vpop.f32.mrb[0].mxu0
        %v1125 = vadd.f32 %v999, %v1124
        %v1126 = vpop.f32.mrb[0].mxu0
        %1127 = vdwg.mxu0
        %1128 = vrot.lane.b32.xlu0 %v368, 80
        %v1129 = vpop.permute.xlu0 %1128
        %v1131 = vadd.f32 %v1066, %v1129
        %v1132 = vadd.f32 %v1069, %v1129
        %v1133 = vadd.f32 %v1074, %v1129
        %v1134 = vadd.f32 %v1077, %v1129
        %v1135 = vadd.f32 %v1082, %v1129
        %v1136 = vadd.f32 %v1085, %v1129
        %v1137 = vadd.f32 %v1090, %v1129
        %v1138 = vadd.f32 %v1093, %v1129
        %v1139 = vadd.f32 %v1098, %v1129
        %v1140 = vadd.f32 %v1101, %v1129
        %v1141 = vadd.f32 %v1106, %v1129
        %v1142 = vadd.f32 %v1109, %v1129
        %v1143 = vadd.f32 %v1114, %v1129
        %v1144 = vadd.f32 %v1117, %v1129
        %v1145 = vadd.f32 %v1122, %v1129
        %v1146 = vadd.f32 %v1125, %v1129
        %v1147 = vmax.f32 %v1131, 0.0
        %v1148 = vmax.f32 %v1132, 0.0
        %v1149 = vmax.f32 %v1133, 0.0
        %v1150 = vmax.f32 %v1134, 0.0
        %v1151 = vmax.f32 %v1135, 0.0
        %v1152 = vmax.f32 %v1136, 0.0
        %v1153 = vmax.f32 %v1137, 0.0
        %v1154 = vmax.f32 %v1138, 0.0
        %v1155 = vmax.f32 %v1139, 0.0
        %v1156 = vmax.f32 %v1140, 0.0
        %v1157 = vmax.f32 %v1141, 0.0
        %v1158 = vmax.f32 %v1142, 0.0
        %v1159 = vmax.f32 %v1143, 0.0
        %v1160 = vmax.f32 %v1144, 0.0
        %v1161 = vmax.f32 %v1145, 0.0
        %v1162 = vmax.f32 %v1146, 0.0
        %v1163 = vpack.c.bf16 %v1148, %v1147
        %v1164 = vpack.c.bf16 %v1150, %v1149
        %v1165 = vpack.c.bf16 %v1152, %v1151
        %v1166 = vpack.c.bf16 %v1154, %v1153
        %v1167 = vpack.c.bf16 %v1156, %v1155
        %v1168 = vpack.c.bf16 %v1158, %v1157
        %v1169 = vpack.c.bf16 %v1160, %v1159
        %v1170 = vpack.c.bf16 %v1162, %v1161
        %1173 = vrot.lane.b32.xlu0 %v520, 112
        %v1174 = vpop.permute.xlu0 %1173
        %1175 = vrot.lane.b32.xlu0 %v521, 112
        %v1176 = vpop.permute.xlu0 %1175
        %1179 = vrot.lane.b32.xlu0 %v368, 48
        %v1180 = vpop.permute.xlu0 %1179
        %v1183 = vsel %vm525, %v1163, 0
        %v1186 = vsel %vm525, %v1164, 0
        %v1189 = vsel %vm525, %v1165, 0
        %v1192 = vsel %vm525, %v1166, 0
        %v1195 = vsel %vm525, %v1167, 0
        %v1198 = vsel %vm525, %v1168, 0
        %v1201 = vsel %vm525, %v1169, 0
        %v1204 = vsel %vm525, %v1170, 0
        %1206 = vmatprep.subr.bf16.mxu0 0
        %1207 = vmatpush1.bf16.msra.mxu0 %v1174
        %1208 = vmatprep.subr.bf16.mxu0 0
        %1209 = vmatpush1.bf16.msra.mxu0 %v1176
        %1210 = vmatprep.subr.bf16.mxu0 0
        %1211 = vmatpush1.bf16.msra.mxu0 0
        %1212 = vmatprep.subr.bf16.mxu0 0
        %1213 = vmatpush1.bf16.msra.mxu0 0
        %1214 = vmatprep.subr.bf16.mxu0 0
        %1215 = vmatpush1.bf16.msra.mxu0 0
        %1216 = vmatprep.subr.bf16.mxu0 0
        %1217 = vmatpush1.bf16.msra.mxu0 0
        %1218 = vmatprep.subr.bf16.mxu0 0
        %1219 = vmatpush1.bf16.msra.mxu0 0
        %1220 = vmatprep.subr.bf16.mxu0 0
        %1221 = vmatpush1.bf16.msra.mxu0 0
        %1222 = vmatprep.subr.bf16.mxu0 0
        %1223 = vmatpush1.bf16.msra.mxu0 0
        %1224 = vmatprep.subr.bf16.mxu0 0
        %1225 = vmatpush1.bf16.msra.mxu0 0
        %1226 = vmatprep.subr.bf16.mxu0 0
        %1227 = vmatpush1.bf16.msra.mxu0 0
        %1228 = vmatprep.subr.bf16.mxu0 0
        %1229 = vmatpush1.bf16.msra.mxu0 0
        %1230 = vmatprep.subr.bf16.mxu0 0
        %1231 = vmatpush1.bf16.msra.mxu0 0
        %1232 = vmatprep.subr.bf16.mxu0 0
        %1233 = vmatpush1.bf16.msra.mxu0 0
        %1234 = vmatprep.subr.bf16.mxu0 0
        %1235 = vmatpush1.bf16.msra.mxu0 0
        %1236 = vmatprep.subr.bf16.mxu0 0
        %1237 = vmatpush1.bf16.msra.mxu0 0
        %1238 = vmatprep.mubr.bf16.mxu0 0
        %1239 = vmatmul.mubr.bf16.gmra.mrb[0].mxu0 %v1183
        %v1240 = vpop.f32.mrb[0].mxu0
        %v1241 = vadd.f32 %v1180, %v1240
        %v1242 = vpop.f32.mrb[0].mxu0
        %v1243 = vpop.f32.mrb[0].mxu0
        %v1244 = vadd.f32 %v1180, %v1243
        %v1245 = vpop.f32.mrb[0].mxu0
        %1246 = vmatprep.mubr.bf16.mxu0 0
        %1247 = vmatmul.mubr.bf16.gmra.mrb[0].mxu0 %v1186
        %v1248 = vpop.f32.mrb[0].mxu0
        %v1249 = vadd.f32 %v1180, %v1248
        %v1250 = vpop.f32.mrb[0].mxu0
        %v1251 = vpop.f32.mrb[0].mxu0
        %v1252 = vadd.f32 %v1180, %v1251
        %v1253 = vpop.f32.mrb[0].mxu0
        %1254 = vmatprep.mubr.bf16.mxu0 0
        %1255 = vmatmul.mubr.bf16.gmra.mrb[0].mxu0 %v1189
        %v1256 = vpop.f32.mrb[0].mxu0
        %v1257 = vadd.f32 %v1180, %v1256
        %v1258 = vpop.f32.mrb[0].mxu0
        %v1259 = vpop.f32.mrb[0].mxu0
        %v1260 = vadd.f32 %v1180, %v1259
        %v1261 = vpop.f32.mrb[0].mxu0
        %1262 = vmatprep.mubr.bf16.mxu0 0
        %1263 = vmatmul.mubr.bf16.gmra.mrb[0].mxu0 %v1192
        %v1264 = vpop.f32.mrb[0].mxu0
        %v1265 = vadd.f32 %v1180, %v1264
        %v1266 = vpop.f32.mrb[0].mxu0
        %v1267 = vpop.f32.mrb[0].mxu0
        %v1268 = vadd.f32 %v1180, %v1267
        %v1269 = vpop.f32.mrb[0].mxu0
        %1270 = vmatprep.mubr.bf16.mxu0 0
        %1271 = vmatmul.mubr.bf16.gmra.mrb[0].mxu0 %v1195
        %v1272 = vpop.f32.mrb[0].mxu0
        %v1273 = vadd.f32 %v1180, %v1272
        %v1274 = vpop.f32.mrb[0].mxu0
        %v1275 = vpop.f32.mrb[0].mxu0
        %v1276 = vadd.f32 %v1180, %v1275
        %v1277 = vpop.f32.mrb[0].mxu0
        %1278 = vmatprep.mubr.bf16.mxu0 0
        %1279 = vmatmul.mubr.bf16.gmra.mrb[0].mxu0 %v1198
        %v1280 = vpop.f32.mrb[0].mxu0
        %v1281 = vadd.f32 %v1180, %v1280
        %v1282 = vpop.f32.mrb[0].mxu0
        %v1283 = vpop.f32.mrb[0].mxu0
        %v1284 = vadd.f32 %v1180, %v1283
        %v1285 = vpop.f32.mrb[0].mxu0
        %1286 = vmatprep.mubr.bf16.mxu0 0
        %1287 = vmatmul.mubr.bf16.gmra.mrb[0].mxu0 %v1201
        %v1288 = vpop.f32.mrb[0].mxu0
        %v1289 = vadd.f32 %v1180, %v1288
        %v1290 = vpop.f32.mrb[0].mxu0
        %v1291 = vpop.f32.mrb[0].mxu0
        %v1292 = vadd.f32 %v1180, %v1291
        %v1293 = vpop.f32.mrb[0].mxu0
        %1294 = vmatprep.mubr.bf16.mxu0 0
        %1295 = vmatmul.mubr.bf16.gmra.mrb[0].mxu0 %v1204
        %v1296 = vpop.f32.mrb[0].mxu0
        %v1297 = vadd.f32 %v1180, %v1296
        %v1298 = vpop.f32.mrb[0].mxu0
        %v1299 = vpop.f32.mrb[0].mxu0
        %v1300 = vadd.f32 %v1180, %v1299
        %v1301 = vpop.f32.mrb[0].mxu0
        %1302 = vdwg.mxu0
        %v1303 = vxor.u32 %v1241, 2147483648
        %v1304 = vxor.u32 %v1244, 2147483648
        %v1305 = vxor.u32 %v1249, 2147483648
        %v1306 = vxor.u32 %v1252, 2147483648
        %v1307 = vxor.u32 %v1257, 2147483648
        %v1308 = vxor.u32 %v1260, 2147483648
        %v1309 = vxor.u32 %v1265, 2147483648
        %v1310 = vxor.u32 %v1268, 2147483648
        %v1311 = vxor.u32 %v1273, 2147483648
        %v1312 = vxor.u32 %v1276, 2147483648
        %v1313 = vxor.u32 %v1281, 2147483648
        %v1314 = vxor.u32 %v1284, 2147483648
        %v1315 = vxor.u32 %v1289, 2147483648
        %v1316 = vxor.u32 %v1292, 2147483648
        %v1317 = vxor.u32 %v1297, 2147483648
        %v1318 = vxor.u32 %v1300, 2147483648
        %v1319 = vmul.f32 %v1303, 1.442695
        %v1320 = vpow.pop %v1319
        %v1321 = vmul.f32 %v1304, 1.442695
        %v1322 = vpow.pop %v1321
        %v1323 = vmul.f32 %v1305, 1.442695
        %v1324 = vpow.pop %v1323
        %v1325 = vmul.f32 %v1306, 1.442695
        %v1326 = vpow.pop %v1325
        %v1327 = vmul.f32 %v1307, 1.442695
        %v1328 = vpow.pop %v1327
        %v1329 = vmul.f32 %v1308, 1.442695
        %v1330 = vpow.pop %v1329
        %v1331 = vmul.f32 %v1309, 1.442695
        %v1332 = vpow.pop %v1331
        %v1333 = vmul.f32 %v1310, 1.442695
        %v1334 = vpow.pop %v1333
        %v1335 = vmul.f32 %v1311, 1.442695
        %v1336 = vpow.pop %v1335
        %v1337 = vmul.f32 %v1312, 1.442695
        %v1338 = vpow.pop %v1337
        %v1339 = vmul.f32 %v1313, 1.442695
        %v1340 = vpow.pop %v1339
        %v1341 = vmul.f32 %v1314, 1.442695
        %v1342 = vpow.pop %v1341
        %v1343 = vmul.f32 %v1315, 1.442695
        %v1344 = vpow.pop %v1343
        %v1345 = vmul.f32 %v1316, 1.442695
        %v1346 = vpow.pop %v1345
        %v1347 = vmul.f32 %v1317, 1.442695
        %v1348 = vpow.pop %v1347
        %v1349 = vmul.f32 %v1318, 1.442695
        %v1350 = vpow.pop %v1349
        %v1351 = vadd.f32 %v1320, 1.0
        %v1352 = vadd.f32 %v1322, 1.0
        %v1353 = vadd.f32 %v1324, 1.0
        %v1354 = vadd.f32 %v1326, 1.0
        %v1355 = vadd.f32 %v1328, 1.0
        %v1356 = vadd.f32 %v1330, 1.0
        %v1357 = vadd.f32 %v1332, 1.0
        %v1358 = vadd.f32 %v1334, 1.0
        %v1359 = vadd.f32 %v1336, 1.0
        %v1360 = vadd.f32 %v1338, 1.0
        %v1361 = vadd.f32 %v1340, 1.0
        %v1362 = vadd.f32 %v1342, 1.0
        %v1363 = vadd.f32 %v1344, 1.0
        %v1364 = vadd.f32 %v1346, 1.0
        %v1365 = vadd.f32 %v1348, 1.0
        %v1366 = vadd.f32 %v1350, 1.0
        %v1367 = vrcp.pop %v1351
        %v1368 = vmul.f32 1.0, %v1367
        %v1369 = vrcp.pop %v1352
        %v1370 = vmul.f32 1.0, %v1369
        %v1371 = vrcp.pop %v1353
        %v1372 = vmul.f32 1.0, %v1371
        %v1373 = vrcp.pop %v1354
        %v1374 = vmul.f32 1.0, %v1373
        %v1375 = vrcp.pop %v1355
        %v1376 = vmul.f32 1.0, %v1375
        %v1377 = vrcp.pop %v1356
        %v1378 = vmul.f32 1.0, %v1377
        %v1379 = vrcp.pop %v1357
        %v1380 = vmul.f32 1.0, %v1379
        %v1381 = vrcp.pop %v1358
        %v1382 = vmul.f32 1.0, %v1381
        %v1383 = vrcp.pop %v1359
        %v1384 = vmul.f32 1.0, %v1383
        %v1385 = vrcp.pop %v1360
        %v1386 = vmul.f32 1.0, %v1385
        %v1387 = vrcp.pop %v1361
        %v1388 = vmul.f32 1.0, %v1387
        %v1389 = vrcp.pop %v1362
        %v1390 = vmul.f32 1.0, %v1389
        %v1391 = vrcp.pop %v1363
        %v1392 = vmul.f32 1.0, %v1391
        %v1393 = vrcp.pop %v1364
        %v1394 = vmul.f32 1.0, %v1393
        %v1395 = vrcp.pop %v1365
        %v1396 = vmul.f32 1.0, %v1395
        %v1397 = vrcp.pop %v1366
        %v1398 = vmul.f32 1.0, %v1397
        %1415 = vrot.lane.b32.xlu0 %v585, 12
        %v1416 = vpop.permute.xlu0 %1415
        %1417 = vrot.lane.b32.xlu0 %v588, 12
        %v1418 = vpop.permute.xlu0 %1417
        %1419 = vrot.lane.b32.xlu0 %v593, 12
        %v1420 = vpop.permute.xlu0 %1419
        %1421 = vrot.lane.b32.xlu0 %v596, 12
        %v1422 = vpop.permute.xlu0 %1421
        %1423 = vrot.lane.b32.xlu0 %v601, 12
        %v1424 = vpop.permute.xlu0 %1423
        %1425 = vrot.lane.b32.xlu0 %v604, 12
        %v1426 = vpop.permute.xlu0 %1425
        %1427 = vrot.lane.b32.xlu0 %v609, 12
        %v1428 = vpop.permute.xlu0 %1427
        %1429 = vrot.lane.b32.xlu0 %v612, 12
        %v1430 = vpop.permute.xlu0 %1429
        %1431 = vrot.lane.b32.xlu0 %v617, 12
        %v1432 = vpop.permute.xlu0 %1431
        %1433 = vrot.lane.b32.xlu0 %v620, 12
        %v1434 = vpop.permute.xlu0 %1433
        %1435 = vrot.lane.b32.xlu0 %v625, 12
        %v1436 = vpop.permute.xlu0 %1435
        %1437 = vrot.lane.b32.xlu0 %v628, 12
        %v1438 = vpop.permute.xlu0 %1437
        %1439 = vrot.lane.b32.xlu0 %v633, 12
        %v1440 = vpop.permute.xlu0 %1439
        %1441 = vrot.lane.b32.xlu0 %v636, 12
        %v1442 = vpop.permute.xlu0 %1441
        %1443 = vrot.lane.b32.xlu0 %v641, 12
        %v1444 = vpop.permute.xlu0 %1443
        %1445 = vrot.lane.b32.xlu0 %v644, 12
        %v1446 = vpop.permute.xlu0 %1445
        %1479 = vrot.lane.b32.xlu0 %v839, 28
        %v1480 = vpop.permute.xlu0 %1479
        %1481 = vrot.lane.b32.xlu0 %v840, 28
        %v1482 = vpop.permute.xlu0 %1481
        %1483 = vrot.lane.b32.xlu0 %v841, 28
        %v1484 = vpop.permute.xlu0 %1483
        %1485 = vrot.lane.b32.xlu0 %v842, 28
        %v1486 = vpop.permute.xlu0 %1485
        %1487 = vrot.lane.b32.xlu0 %v843, 28
        %v1488 = vpop.permute.xlu0 %1487
        %1489 = vrot.lane.b32.xlu0 %v844, 28
        %v1490 = vpop.permute.xlu0 %1489
        %1491 = vrot.lane.b32.xlu0 %v845, 28
        %v1492 = vpop.permute.xlu0 %1491
        %1493 = vrot.lane.b32.xlu0 %v846, 28
        %v1494 = vpop.permute.xlu0 %1493
        %1495 = vrot.lane.b32.xlu0 %v847, 28
        %v1496 = vpop.permute.xlu0 %1495
        %1497 = vrot.lane.b32.xlu0 %v848, 28
        %v1498 = vpop.permute.xlu0 %1497
        %1499 = vrot.lane.b32.xlu0 %v849, 28
        %v1500 = vpop.permute.xlu0 %1499
        %1501 = vrot.lane.b32.xlu0 %v850, 28
        %v1502 = vpop.permute.xlu0 %1501
        %1503 = vrot.lane.b32.xlu0 %v851, 28
        %v1504 = vpop.permute.xlu0 %1503
        %1505 = vrot.lane.b32.xlu0 %v852, 28
        %v1506 = vpop.permute.xlu0 %1505
        %1507 = vrot.lane.b32.xlu0 %v853, 28
        %v1508 = vpop.permute.xlu0 %1507
        %1509 = vrot.lane.b32.xlu0 %v854, 28
        %v1510 = vpop.permute.xlu0 %1509
        %v1527 = vsel %vm370, %v1368, %v1416
        %v1528 = vsel %vm370, %v1370, %v1418
        %v1529 = vsel %vm370, %v1372, %v1420
        %v1530 = vsel %vm370, %v1374, %v1422
        %v1531 = vsel %vm370, %v1376, %v1424
        %v1532 = vsel %vm370, %v1378, %v1426
        %v1533 = vsel %vm370, %v1380, %v1428
        %v1534 = vsel %vm370, %v1382, %v1430
        %v1535 = vsel %vm370, %v1384, %v1432
        %v1536 = vsel %vm370, %v1386, %v1434
        %v1537 = vsel %vm370, %v1388, %v1436
        %v1538 = vsel %vm370, %v1390, %v1438
        %v1539 = vsel %vm370, %v1392, %v1440
        %v1540 = vsel %vm370, %v1394, %v1442
        %v1541 = vsel %vm370, %v1396, %v1444
        %v1542 = vsel %vm370, %v1398, %v1446
        %vm1543 = vcmask 162816
        %v1544 = vsel %vm1543, %v1527, %v1416
        %v1545 = vsel %vm1543, %v1528, %v1418
        %v1546 = vsel %vm1543, %v1529, %v1420
        %v1547 = vsel %vm1543, %v1530, %v1422
        %v1548 = vsel %vm1543, %v1531, %v1424
        %v1549 = vsel %vm1543, %v1532, %v1426
        %v1550 = vsel %vm1543, %v1533, %v1428
        %v1551 = vsel %vm1543, %v1534, %v1430
        %v1552 = vsel %vm1543, %v1535, %v1432
        %v1553 = vsel %vm1543, %v1536, %v1434
        %v1554 = vsel %vm1543, %v1537, %v1436
        %v1555 = vsel %vm1543, %v1538, %v1438
        %v1556 = vsel %vm1543, %v1539, %v1440
        %v1557 = vsel %vm1543, %v1540, %v1442
        %v1558 = vsel %vm1543, %v1541, %v1444
        %v1559 = vsel %vm1543, %v1542, %v1446
        %vm1560 = vcmask 228352
        %v1561 = vsel %vm1560, %v1544, %v1480
        %v1562 = vsel %vm1560, %v1545, %v1482
        %v1563 = vsel %vm1560, %v1546, %v1484
        %v1564 = vsel %vm1560, %v1547, %v1486
        %v1565 = vsel %vm1560, %v1548, %v1488
        %v1566 = vsel %vm1560, %v1549, %v1490
        %v1567 = vsel %vm1560, %v1550, %v1492
        %v1568 = vsel %vm1560, %v1551, %v1494
        %v1569 = vsel %vm1560, %v1552, %v1496
        %v1570 = vsel %vm1560, %v1553, %v1498
        %v1571 = vsel %vm1560, %v1554, %v1500
        %v1572 = vsel %vm1560, %v1555, %v1502
        %v1573 = vsel %vm1560, %v1556, %v1504
        %v1574 = vsel %vm1560, %v1557, %v1506
        %v1575 = vsel %vm1560, %v1558, %v1508
        %v1576 = vsel %vm1560, %v1559, %v1510
        %vm1577 = vcmask 293888
        %v1578 = vsel %vm1577, %v1561, 0.0
        %v1579 = vsel %vm1577, %v1562, 0.0
        %v1580 = vsel %vm1577, %v1563, 0.0
        %v1581 = vsel %vm1577, %v1564, 0.0
        %v1582 = vsel %vm1577, %v1565, 0.0
        %v1583 = vsel %vm1577, %v1566, 0.0
        %v1584 = vsel %vm1577, %v1567, 0.0
        %v1585 = vsel %vm1577, %v1568, 0.0
        %v1586 = vsel %vm1577, %v1569, 0.0
        %v1587 = vsel %vm1577, %v1570, 0.0
        %v1588 = vsel %vm1577, %v1571, 0.0
        %v1589 = vsel %vm1577, %v1572, 0.0
        %v1590 = vsel %vm1577, %v1573, 0.0
        %v1591 = vsel %vm1577, %v1574, 0.0
        %v1592 = vsel %vm1577, %v1575, 0.0
        %v1593 = vsel %vm1577, %v1576, 0.0
        %1594 = vst [vmem:[%s277] sm:$0xff] %v1578
        %1595 = vst [vmem:[%s277 + $0x8] sm:$0xff] %v1579
        %1596 = vst [vmem:[%s277 + $0x10] sm:$0xff] %v1580
        %1597 = vst [vmem:[%s277 + $0x18] sm:$0xff] %v1581
        %1598 = vst [vmem:[%s277 + $0x20] sm:$0xff] %v1582
        %1599 = vst [vmem:[%s277 + $0x28] sm:$0xff] %v1583
        %1600 = vst [vmem:[%s277 + $0x30] sm:$0xff] %v1584
        %1601 = vst [vmem:[%s277 + $0x38] sm:$0xff] %v1585
        %1602 = vst [vmem:[%s277 + $0x40] sm:$0xff] %v1586
        %1603 = vst [vmem:[%s277 + $0x48] sm:$0xff] %v1587
        %1604 = vst [vmem:[%s277 + $0x50] sm:$0xff] %v1588
        %1605 = vst [vmem:[%s277 + $0x58] sm:$0xff] %v1589
        %1606 = vst [vmem:[%s277 + $0x60] sm:$0xff] %v1590
        %1607 = vst [vmem:[%s277 + $0x68] sm:$0xff] %v1591
        %1608 = vst [vmem:[%s277 + $0x70] sm:$0xff] %v1592
        %1609 = vst [vmem:[%s277 + $0x78] sm:$0xff] %v1593
        %s1610 = sand.u32 %s169, 1
        %s1611 = scalar_lea.sflag [#allocation3], %s1610
        %s1612 = sand.u32 %s169, 1
        %s1613 = smul.addr %s1612, 128
        %s1614 = scalar_lea.vmem [#allocation2], %s1613
        // Predicated region
        $region45: #{tpu_custom_call.1} parent=43 // pred_check
          %p1615 = pneg %p179
        $region46: #{tpu_custom_call.1} parent=43 // pred_check_branch
          %1617 = sbr.rel (%p1615) target = $region48
        $region47: #{tpu_custom_call.1} parent=43 // pred_region
          %s1618 = smul.u32 16, %s20
          %s1620 = ssub.s32 2048, 2048
          %1621 = vsyncadd %s1611, %s1620
          %s1622 = smul.addr %s1618, 128
          %s1623 = scalar_lea.hbm %s6, %s1622
          %s1624 = sshll.u32 %s1614, 4
          %s1625 = int_to_ptr.vmem [resolvable:$true] %s1624
          %1630 = dma.vmem_to_hbm [thread:$0]  %s1625, 2048, %s1623, %s1611, 128, 128, 8
        $region48: #{tpu_custom_call.1} parent=43 // pred_fallthru
          _
      $region44: #{tpu_custom_call.1} parent=5 // pred_fallthru
        _
      %p1631 = scmp.le.s32.totalorder 2, %s15
      // Predicated region
      $region49: #{tpu_custom_call.1} parent=5 // pred_check
        %p1632 = pneg %p1631
      $region50: #{tpu_custom_call.1} parent=5 // pred_check_branch
        %1634 = sbr.rel (%p1632) target = $region52
      $region51: #{tpu_custom_call.1} parent=5 // pred_region
        %s1635 = ssub.s32 %s15, 2
        // Predicated region
        $region53: #{tpu_custom_call.1} parent=51 // pred_check
          %p1636 = pneg %p185
        $region54: #{tpu_custom_call.1} parent=51 // pred_check_branch
          %1638 = sbr.rel (%p1636) target = $region56
        $region55: #{tpu_custom_call.1} parent=51 // pred_region
          %s1639 = sand.u32 %s170, 1
          %s1640 = scalar_lea.sflag [#allocation3], %s1639
          %s1641 = sand.u32 %s170, 1
          %s1642 = smul.addr %s1641, 128
          %s1643 = scalar_lea.vmem [#allocation2], %s1642
          %1644 = dma.done %s1640, 2048
        $region56: #{tpu_custom_call.1} parent=51 // pred_fallthru
          _
      $region52: #{tpu_custom_call.1} parent=5 // pred_fallthru
        _
    $region6: #{tpu_custom_call.1} parent=1 // loop_footer
      %s19 = sadd.s32 1, %s15
    $region7: #{tpu_custom_call.1} parent=1 // loop_footer_branch
      %14 = sbr.rel target = $region3
    $region8: #{tpu_custom_call.1} parent=1 // loop_exit
      _
    %1645 = vsyncpa [#allocation3], 1
    %s1646 = scalar_lea.sflag [#allocation3], 1
    %1647 = vsyncpa %s1646, 1

</llo_original>
